<compile_context>
chip_gen: v7x
topology: tpu7x:2x2x1
jax: 0.10.0
libtpu: 0.0.40
codegen_flags: <defaults>
</compile_context>

<pallas_src>
import numpy as np
import jax
import jax.numpy as jnp
from jax import lax
from jax.experimental import pallas as pl
from jax.experimental.pallas import tpu as pltpu

BN_EPS = 1e-5
BN_SCALE = 1.0 / float(np.sqrt(1.0 + BN_EPS))  # eval-mode BN with default stats


# --------------------------------------------------------------------------- #
# Fused Pallas kernel: one grid step per batch element, everything in VMEM.
# --------------------------------------------------------------------------- #
def _build_fused_kernel(H, W, C, P2, off):
    HW = H * W

    def kernel(x_ref, wd1_ref, bd1_ref, wd2_ref, bd2_ref, wd3_ref, bd3_ref,
               wpsi_ref, bpsi_ref, kt_ref, wfre_ref, bfre_ref,
               wfc1_ref, wfc2t_ref, col_ref, row_ref,
               o_ref, scr):
        x2 = x_ref[0]                     # (C, HW)   lane-dense activations
        col = col_ref[...]                # (1, HW)   w coordinate per position
        row = row_ref[...]                # (1, HW)   h coordinate per position

        # Zero the scratch; later stores only touch the data window
        # [off, off+HW), so the halo columns stay zero for every reuse below.
        scr[...] = jnp.zeros_like(scr)

        # Column-validity masks for every horizontal offset used below
        # (computed once, reused by all convs / edgemap).
        cmask = {0: None}
        for d in (1, 3, 5):
            cmask[d] = (col < float(W - d)).astype(jnp.float32)   # neighbour w+d
            cmask[-d] = (col >= float(d)).astype(jnp.float32)     # neighbour w-d

        def shifted_stack(inp, n_in, dil):
            """Stage inp in scratch, return the 9 shifted+masked taps stacked
            along sublanes: (9*n_in, HW)."""
            scr[0:n_in, off:off + HW] = inp
            taps = []
            for ky in range(3):
                for kx in range(3):
                    oy = (ky - 1) * dil
                    ox = (kx - 1) * dil
                    s = off + oy * W + ox
                    t = scr[0:n_in, s:s + HW]        # flattened spatial shift
                    m = cmask[ox]
                    if m is not None:
                        t = t * m                    # horizontal zero-padding
                    taps.append(t)
            return jnp.concatenate(taps, axis=0)

        def conv3x3_same(inp, w_ref, b_ref, dil, n_in):
            """Zero-padded dilated 3x3 conv as ONE MXU dot (Cout,9Cin)@(9Cin,HW)."""
            st = shifted_stack(inp, n_in, dil)
            return jnp.dot(w_ref[...], st,
                           preferred_element_type=jnp.float32) + b_ref[...]

        # ---- dilated conv chain (NO relu between the chained convs) ---------
        t1 = conv3x3_same(x2, wd1_ref, bd1_ref, 1, C)      # (P2, HW)
        t2 = conv3x3_same(t1, wd2_ref, bd2_ref, 3, P2)
        t3 = conv3x3_same(t2, wd3_ref, bd3_ref, 5, P2)

        # ---- psi = sigmoid(BN(conv1x1(relu(t1)+relu(t2)+relu(t3)))) ----------
        fea = (jnp.maximum(t1, 0.0) + jnp.maximum(t2, 0.0)
               + jnp.maximum(t3, 0.0))                                # (P2, HW)
        logit = jnp.sum(fea * wpsi_ref[...], axis=0, keepdims=True)   # (1, HW)
        psi = 1.0 / (1.0 + jnp.exp(-(logit + bpsi_ref[...]) * BN_SCALE))

        # ---- edgemap = relu(Gedge_map(psi) + psi);  x_att = x * edgemap ------
        # TODO(synk): Gedge_map undefined in source; fixed 3x3 Laplacian used.
        scr[0:1, off:off + HW] = psi
        nbs = []
        for ky in range(3):
            for kx in range(3):
                if ky == 1 and kx == 1:
                    continue
                s = off + (ky - 1) * W + (kx - 1)
                nb = scr[0:1, s:s + HW]
                m = cmask[kx - 1]
                if m is not None:
                    nb = nb * m
                nbs.append(nb)
        nsum = (((nbs[0] + nbs[1]) + (nbs[2] + nbs[3]))
                + ((nbs[4] + nbs[5]) + (nbs[6] + nbs[7])))   # balanced tree
        edgemap = jnp.maximum(9.0 * psi - nsum, 0.0)                  # (1, HW)
        x_att = x2 * edgemap                                          # (C, HW)

        # ---- frequency branch: dct_2d -> frecoder conv + BN + ReLU (in VMEM) -
        # dct_2d(X) = DH @ X @ DW^T per channel  ==  X_flat @ kron(DH, DW)^T
        xd = jnp.dot(x2, kt_ref[...], preferred_element_type=jnp.float32)
        scr[0:C, off:off + HW] = xd
        ftaps = []
        for ky in range(3):
            for kx in range(3):
                s = off + ky * W + kx                 # valid conv, taps 0..2
                ftaps.append(scr[0:C, s:s + HW])
        stf = jnp.concatenate(ftaps, axis=0)                          # (9C, HW)
        fr = jnp.maximum((jnp.dot(wfre_ref[...], stf,
                                  preferred_element_type=jnp.float32)
                          + bfre_ref[...]) * BN_SCALE, 0.0)           # (C, HW)
        # global max-pool restricted to the valid (H-2)x(W-2) window (fr >= 0)
        validf = ((col <= float(W - 3)).astype(jnp.float32)
                  * (row <= float(H - 3)).astype(jnp.float32))
        y0_col = jnp.max(fr * validf, axis=1, keepdims=True)          # (C, 1)

        # ---- SE head: y = sigmoid(relu(y0 W1) W2) + y0;  out = x_att*(y+1) ---
        # broadcast+reduce contractions -> no transposes, no tiny matmuls
        h_row = jnp.maximum(jnp.sum(y0_col * wfc1_ref[...],
                                    axis=0, keepdims=True), 0.0)      # (1, C2)
        s_col = jnp.sum(wfc2t_ref[...] * h_row, axis=1, keepdims=True)  # (C, 1)
        y_col = 1.0 / (1.0 + jnp.exp(-s_col)) + y0_col                # (C, 1)
        o_ref[0] = x_att * (y_col + 1.0)

    return kernel


# --------------------------------------------------------------------------- #
# Host-side weight packing helpers (run under jit, outside the kernel)
# --------------------------------------------------------------------------- #
def _pack_taps(w9, co_pad, ci_pad):
    """(9, co, ci) -> zero-pad to (9, co_pad, ci_pad) -> (co_pad, 9*ci_pad)."""
    _, co, ci = w9.shape
    w = jnp.zeros((9, co_pad, ci_pad), jnp.float32).at[:, :co, :ci].set(w9)
    return jnp.transpose(w, (1, 0, 2)).reshape(co_pad, 9 * ci_pad)


def _pad_col(v, n):
    """(m, 1) -> (n, 1) zero-padded."""
    m = v.shape[0]
    return jnp.zeros((n, 1), jnp.float32).at[:m, :].set(v)


# --------------------------------------------------------------------------- #
# Host wrapper (NCHW in / NCHW out, PyTorch layout)
# --------------------------------------------------------------------------- #
@jax.jit
def local_freattention_forward(x, p):
    """x: (B, C, H, W) float32.  Returns (B, C, H, W) float32."""
    B, C, H, W = x.shape
    C2 = C // 2
    HW = H * W
    P2 = ((max(C2, 1) + 7) // 8) * 8          # pad hidden channels to sublane tile
    SR = max(C, P2)

    # Lane-aligned halo: must cover the largest flattened shift, 5*(W+1).
    pad_need = max(5 * (W + 1), 2 * W + 2)
    off = ((pad_need + 127) // 128) * 128

    x_flat = x.reshape(B, C, HW)                       # free row-major merge
    kt = jnp.kron(p['DH'], p['DW']).T                  # (HW, HW) DCT-II matrix
    col = jnp.tile(jnp.arange(W, dtype=jnp.float32), H).reshape(1, HW)
    row = jnp.repeat(jnp.arange(H, dtype=jnp.float32), W).reshape(1, HW)

    wd1 = _pack_taps(p['w_d1'], P2, C)                 # (P2, 9*C)
    wd2 = _pack_taps(p['w_d2'], P2, P2)                # (P2, 9*P2)
    wd3 = _pack_taps(p['w_d3'], P2, P2)
    wfre = _pack_taps(p['w_fre'], C, C)                # (C, 9*C)
    bd1 = _pad_col(p['b_d1'], P2)
    bd2 = _pad_col(p['b_d2'], P2)
    bd3 = _pad_col(p['b_d3'], P2)
    wpsi = _pad_col(p['w_psi'], P2)
    wfc2t = p['w_fc2'].T                               # (C, C2)

    def full(a):
        n = len(a.shape)
        return pl.BlockSpec(a.shape, lambda b, n=n: (0,) * n)

    out_flat = pl.pallas_call(
        _build_fused_kernel(H, W, C, P2, off),
        out_shape=jax.ShapeDtypeStruct((B, C, HW), jnp.float32),
        grid=(B,),
        in_specs=[
            pl.BlockSpec((1, C, HW), lambda b: (b, 0, 0)),     # x
            full(wd1), full(bd1),                              # dilate1
            full(wd2), full(bd2),                              # dilate2
            full(wd3), full(bd3),                              # dilate3
            full(wpsi), full(p['b_psi']),                      # psi 1x1 conv
            full(kt),                                          # kron(DH, DW)^T
            full(wfre), full(p['b_fre']),                      # frecoder conv
            full(p['w_fc1']), full(wfc2t),                     # fc weights
            full(col), full(row),                              # coordinates
        ],
        out_specs=pl.BlockSpec((1, C, HW), lambda b: (b, 0, 0)),
        scratch_shapes=[pltpu.VMEM((SR, off + HW + off), jnp.float32)],
        compiler_params=pltpu.CompilerParams(
            dimension_semantics=("parallel",)),                # v7x: 2 TCs over B
    )(x_flat, wd1, bd1, wd2, bd2, wd3, bd3, wpsi, p['b_psi'], kt, wfre,
      p['b_fre'], p['w_fc1'], wfc2t, col, row)
    return out_flat.reshape(B, C, H, W)


# --------------------------------------------------------------------------- #
# Pure-JAX reference (matches the PyTorch forward semantics)
# --------------------------------------------------------------------------- #
def _w9_to_oihw(w9):
    _, co, ci = w9.shape
    return jnp.transpose(w9.reshape(3, 3, co, ci), (2, 3, 0, 1))


def reference_forward(x, p):
    hi = lax.Precision.HIGHEST
    relu = lambda a: jnp.maximum(a, 0.0)
    B, C, H, W = x.shape

    def conv(xx, w9, b, d, pad):
        out = lax.conv_general_dilated(
            xx, _w9_to_oihw(w9), (1, 1), [(pad, pad), (pad, pad)],
            rhs_dilation=(d, d),
            dimension_numbers=('NCHW', 'OIHW', 'NCHW'), precision=hi)
        return out + b.reshape(1, -1, 1, 1)

    t1 = conv(x, p['w_d1'], p['b_d1'], 1, 1)
    t2 = conv(t1, p['w_d2'], p['b_d2'], 3, 3)
    t3 = conv(t2, p['w_d3'], p['b_d3'], 5, 5)
    fea = relu(t1) + relu(t2) + relu(t3)
    logit = jnp.einsum('co,bchw->bohw', p['w_psi'], fea, precision=hi)
    psi = jax.nn.sigmoid((logit + p['b_psi'][0, 0]) * BN_SCALE)        # (B,1,H,W)
    pp = jnp.pad(psi, ((0, 0), (0, 0), (1, 1), (1, 1)))
    ged = 8.0 * psi
    for dy in range(3):
        for dx in range(3):
            if dy == 1 and dx == 1:
                continue
            ged = ged - pp[:, :, dy:dy + H, dx:dx + W]
    x_att = x * relu(ged + psi)

    xd = jnp.einsum('kh,bchw->bckw', p['DH'], x, precision=hi)
    xd = jnp.einsum('bckw,lw->bckl', xd, p['DW'], precision=hi)
    fr = relu(conv(xd, p['w_fre'], p['b_fre'], 1, 0) * BN_SCALE)
    y0 = jnp.max(fr, axis=(2, 3))                                      # (B, C)
    h = relu(jnp.dot(y0, p['w_fc1'], precision=hi))
    y = jax.nn.sigmoid(jnp.dot(h, p['w_fc2'], precision=hi)) + y0
    yb = y[:, :, None, None]
    return x_att * yb + x_att


def dct_matrix(N):
    n = jnp.arange(N, dtype=jnp.float32)
    k = jnp.arange(N, dtype=jnp.float32)
    return 2.0 * jnp.cos(jnp.pi * (2.0 * n[None, :] + 1.0) * k[:, None] / (2.0 * N))


# --------------------------------------------------------------------------- #
if __name__ == "__main__":
    B, C, H, W = 2, 8, 16, 16          # PyTorch input layout (B, C, H, W)
    C2 = C // 2

    key = jax.random.PRNGKey(0)
    ks = jax.random.split(key, 12)
    x = jax.random.normal(ks[0], (B, C, H, W), jnp.float32)

    params = {
        # dilated conv weights stored per-tap as (9, Cout, Cin); biases were
        # zeroed in the module's __init__
        'w_d1': 0.1 * jax.random.normal(ks[1], (9, C2, C), jnp.float32),
        'b_d1': jnp.zeros((C2, 1), jnp.float32),
        'w_d2': 0.1 * jax.random.normal(ks[2], (9, C2, C2), jnp.float32),
        'b_d2': jnp.zeros((C2, 1), jnp.float32),
        'w_d3': 0.1 * jax.random.normal(ks[3], (9, C2, C2), jnp.float32),
        'b_d3': jnp.zeros((C2, 1), jnp.float32),
        # psi: Conv2d(C2, 1, 1) + BN(1) + Sigmoid
        'w_psi': 0.1 * jax.random.normal(ks[4], (C2, 1), jnp.float32),
        'b_psi': 0.1 * jax.random.normal(ks[5], (1, 1), jnp.float32),
        # frecoder: Conv2d(C, C, 3, padding=0) + BN(C) + ReLU
        'w_fre': 0.05 * jax.random.normal(ks[6], (9, C, C), jnp.float32),
        'b_fre': 0.1 * jax.random.normal(ks[7], (C, 1), jnp.float32),
        # fc: Linear(C, C2, bias=False) -> ReLU -> Linear(C2, C, bias=False)
        'w_fc1': 0.1 * jax.random.normal(ks[8], (C, C2), jnp.float32),
        'w_fc2': 0.1 * jax.random.normal(ks[9], (C2, C), jnp.float32),
        # DCT-II matrices (torch_dct norm=None convention)
        'DH': dct_matrix(H),
        'DW': dct_matrix(W),
    }
    # NOTE: conv1x1, u1, u2 from __init__ are unused by forward().

    out = jax.block_until_ready(local_freattention_forward(x, params))
    ref = jax.block_until_ready(reference_forward(x, params))

    assert out.shape == (B, C, H, W), out.shape
    err = float(jnp.max(jnp.abs(out - ref)))
    scale = float(jnp.max(jnp.abs(ref))) + 1.0
    if not np.isfinite(err) or err / scale > 2e-3:
        raise SystemExit(f"MISMATCH: max abs err {err} (scale {scale})")
    print("KERNEL_OK")
</pallas_src>

<mosaic_0001>
module attributes {stable_mosaic.version = 11 : i64} {
  func.func @kernel(%arg0: i32, %arg1: memref<1x8x256xf32, #tpu.memory_space<vmem>>, %arg2: memref<8x72xf32, #tpu.memory_space<vmem>>, %arg3: memref<8x1xf32, #tpu.memory_space<vmem>>, %arg4: memref<8x72xf32, #tpu.memory_space<vmem>>, %arg5: memref<8x1xf32, #tpu.memory_space<vmem>>, %arg6: memref<8x72xf32, #tpu.memory_space<vmem>>, %arg7: memref<8x1xf32, #tpu.memory_space<vmem>>, %arg8: memref<8x1xf32, #tpu.memory_space<vmem>>, %arg9: memref<1x1xf32, #tpu.memory_space<vmem>>, %arg10: memref<256x256xf32, #tpu.memory_space<vmem>>, %arg11: memref<8x72xf32, #tpu.memory_space<vmem>>, %arg12: memref<8x1xf32, #tpu.memory_space<vmem>>, %arg13: memref<8x4xf32, #tpu.memory_space<vmem>>, %arg14: memref<8x4xf32, #tpu.memory_space<vmem>>, %arg15: memref<1x256xf32, #tpu.memory_space<vmem>>, %arg16: memref<1x256xf32, #tpu.memory_space<vmem>>, %arg17: memref<1x8x256xf32, #tpu.memory_space<vmem>>, %arg18: memref<8x512xf32, #tpu.memory_space<vmem>>) attributes {dimension_semantics = [#tpu.dimension_semantics<parallel>], iteration_bounds = array<i64: 2>, scalar_prefetch = 0 : i64, scratch_operands = 1 : i64, tpu.core_type = #tpu.core_type<tc>, window_params = [{transform_indices = @transform_0, window_bounds = array<i64: 1, 8, 256>}, {pipeline_mode = #tpu.pipeline_mode<synchronous>, transform_indices = @transform_1, window_bounds = array<i64: 8, 72>}, {pipeline_mode = #tpu.pipeline_mode<synchronous>, transform_indices = @transform_2, window_bounds = array<i64: 8, 1>}, {pipeline_mode = #tpu.pipeline_mode<synchronous>, transform_indices = @transform_3, window_bounds = array<i64: 8, 72>}, {pipeline_mode = #tpu.pipeline_mode<synchronous>, transform_indices = @transform_4, window_bounds = array<i64: 8, 1>}, {pipeline_mode = #tpu.pipeline_mode<synchronous>, transform_indices = @transform_5, window_bounds = array<i64: 8, 72>}, {pipeline_mode = #tpu.pipeline_mode<synchronous>, transform_indices = @transform_6, window_bounds = array<i64: 8, 1>}, {pipeline_mode = #tpu.pipeline_mode<synchronous>, transform_indices = @transform_7, window_bounds = array<i64: 8, 1>}, {pipeline_mode = #tpu.pipeline_mode<synchronous>, transform_indices = @transform_8, window_bounds = array<i64: 1, 1>}, {pipeline_mode = #tpu.pipeline_mode<synchronous>, transform_indices = @transform_9, window_bounds = array<i64: 256, 256>}, {pipeline_mode = #tpu.pipeline_mode<synchronous>, transform_indices = @transform_10, window_bounds = array<i64: 8, 72>}, {pipeline_mode = #tpu.pipeline_mode<synchronous>, transform_indices = @transform_11, window_bounds = array<i64: 8, 1>}, {pipeline_mode = #tpu.pipeline_mode<synchronous>, transform_indices = @transform_12, window_bounds = array<i64: 8, 4>}, {pipeline_mode = #tpu.pipeline_mode<synchronous>, transform_indices = @transform_13, window_bounds = array<i64: 8, 4>}, {pipeline_mode = #tpu.pipeline_mode<synchronous>, transform_indices = @transform_14, window_bounds = array<i64: 1, 256>}, {pipeline_mode = #tpu.pipeline_mode<synchronous>, transform_indices = @transform_15, window_bounds = array<i64: 1, 256>}, {transform_indices = @transform_16, window_bounds = array<i64: 1, 8, 256>}]} {
    %c0 = arith.constant 0 : index
    %c0_0 = arith.constant 0 : index
    %c0_1 = arith.constant 0 : index
    %0 = vector.load %arg1[%c0, %c0_0, %c0_1] : memref<1x8x256xf32, #tpu.memory_space<vmem>>, vector<1x8x256xf32>
    %1 = vector.shape_cast %0 : vector<1x8x256xf32> to vector<8x256xf32>
    %c0_2 = arith.constant 0 : index
    %c0_3 = arith.constant 0 : index
    %2 = vector.load %arg15[%c0_2, %c0_3] : memref<1x256xf32, #tpu.memory_space<vmem>>, vector<1x256xf32>
    %c0_4 = arith.constant 0 : index
    %c0_5 = arith.constant 0 : index
    %3 = vector.load %arg16[%c0_4, %c0_5] : memref<1x256xf32, #tpu.memory_space<vmem>>, vector<1x256xf32>
    %cst = arith.constant 0.000000e+00 : f32
    %4 = vector.broadcast %cst : f32 to vector<8x512xf32>
    %c0_6 = arith.constant 0 : index
    %c0_7 = arith.constant 0 : index
    %5 = vector.load %arg18[%c0_6, %c0_7] : memref<8x512xf32, #tpu.memory_space<vmem>>, vector<8x512xf32>
    tpu.vector_store %arg18[%c0_6, %c0_7], %4 {strides = array<i32>} : memref<8x512xf32, #tpu.memory_space<vmem>>, vector<8x512xf32>,
    %cst_8 = arith.constant 1.500000e+01 : f32
    %6 = vector.broadcast %cst_8 : f32 to vector<1x256xf32>
    %7 = arith.cmpf olt, %2, %6 : vector<1x256xf32>
    %8 = arith.extui %7 : vector<1x256xi1> to vector<1x256xi32>
    %9 = arith.sitofp %8 : vector<1x256xi32> to vector<1x256xf32>
    %cst_9 = arith.constant 1.000000e+00 : f32
    %10 = vector.broadcast %cst_9 : f32 to vector<1x256xf32>
    %11 = arith.cmpf oge, %2, %10 : vector<1x256xf32>
    %12 = arith.extui %11 : vector<1x256xi1> to vector<1x256xi32>
    %13 = arith.sitofp %12 : vector<1x256xi32> to vector<1x256xf32>
    %cst_10 = arith.constant 1.300000e+01 : f32
    %14 = vector.broadcast %cst_10 : f32 to vector<1x256xf32>
    %15 = arith.cmpf olt, %2, %14 : vector<1x256xf32>
    %16 = arith.extui %15 : vector<1x256xi1> to vector<1x256xi32>
    %17 = arith.sitofp %16 : vector<1x256xi32> to vector<1x256xf32>
    %cst_11 = arith.constant 3.000000e+00 : f32
    %18 = vector.broadcast %cst_11 : f32 to vector<1x256xf32>
    %19 = arith.cmpf oge, %2, %18 : vector<1x256xf32>
    %20 = arith.extui %19 : vector<1x256xi1> to vector<1x256xi32>
    %21 = arith.sitofp %20 : vector<1x256xi32> to vector<1x256xf32>
    %cst_12 = arith.constant 1.100000e+01 : f32
    %22 = vector.broadcast %cst_12 : f32 to vector<1x256xf32>
    %23 = arith.cmpf olt, %2, %22 : vector<1x256xf32>
    %24 = arith.extui %23 : vector<1x256xi1> to vector<1x256xi32>
    %25 = arith.sitofp %24 : vector<1x256xi32> to vector<1x256xf32>
    %cst_13 = arith.constant 5.000000e+00 : f32
    %26 = vector.broadcast %cst_13 : f32 to vector<1x256xf32>
    %27 = arith.cmpf oge, %2, %26 : vector<1x256xf32>
    %28 = arith.extui %27 : vector<1x256xi1> to vector<1x256xi32>
    %29 = arith.sitofp %28 : vector<1x256xi32> to vector<1x256xf32>
    %c0_14 = arith.constant 0 : index
    %c128 = arith.constant 128 : index
    %30 = vector.load %arg18[%c0_14, %c128] : memref<8x512xf32, #tpu.memory_space<vmem>>, vector<8x256xf32>
    tpu.vector_store %arg18[%c0_14, %c128], %1 {strides = array<i32>} : memref<8x512xf32, #tpu.memory_space<vmem>>, vector<8x256xf32>,
    %c0_15 = arith.constant 0 : index
    %c111 = arith.constant 111 : index
    %31 = vector.load %arg18[%c0_15, %c111] : memref<8x512xf32, #tpu.memory_space<vmem>>, vector<8x256xf32>
    %32 = vector.broadcast %13 : vector<1x256xf32> to vector<8x256xf32>
    %33 = arith.mulf %31, %32 : vector<8x256xf32>
    %c0_16 = arith.constant 0 : index
    %c112 = arith.constant 112 : index
    %34 = vector.load %arg18[%c0_16, %c112] : memref<8x512xf32, #tpu.memory_space<vmem>>, vector<8x256xf32>
    %c0_17 = arith.constant 0 : index
    %c113 = arith.constant 113 : index
    %35 = vector.load %arg18[%c0_17, %c113] : memref<8x512xf32, #tpu.memory_space<vmem>>, vector<8x256xf32>
    %36 = vector.broadcast %9 : vector<1x256xf32> to vector<8x256xf32>
    %37 = arith.mulf %35, %36 : vector<8x256xf32>
    %c0_18 = arith.constant 0 : index
    %c127 = arith.constant 127 : index
    %38 = vector.load %arg18[%c0_18, %c127] : memref<8x512xf32, #tpu.memory_space<vmem>>, vector<8x256xf32>
    %39 = vector.broadcast %13 : vector<1x256xf32> to vector<8x256xf32>
    %40 = arith.mulf %38, %39 : vector<8x256xf32>
    %c0_19 = arith.constant 0 : index
    %c128_20 = arith.constant 128 : index
    %41 = vector.load %arg18[%c0_19, %c128_20] : memref<8x512xf32, #tpu.memory_space<vmem>>, vector<8x256xf32>
    %c0_21 = arith.constant 0 : index
    %c129 = arith.constant 129 : index
    %42 = vector.load %arg18[%c0_21, %c129] : memref<8x512xf32, #tpu.memory_space<vmem>>, vector<8x256xf32>
    %43 = vector.broadcast %9 : vector<1x256xf32> to vector<8x256xf32>
    %44 = arith.mulf %42, %43 : vector<8x256xf32>
    %c0_22 = arith.constant 0 : index
    %c143 = arith.constant 143 : index
    %45 = vector.load %arg18[%c0_22, %c143] : memref<8x512xf32, #tpu.memory_space<vmem>>, vector<8x256xf32>
    %46 = vector.broadcast %13 : vector<1x256xf32> to vector<8x256xf32>
    %47 = arith.mulf %45, %46 : vector<8x256xf32>
    %c0_23 = arith.constant 0 : index
    %c144 = arith.constant 144 : index
    %48 = vector.load %arg18[%c0_23, %c144] : memref<8x512xf32, #tpu.memory_space<vmem>>, vector<8x256xf32>
    %c0_24 = arith.constant 0 : index
    %c145 = arith.constant 145 : index
    %49 = vector.load %arg18[%c0_24, %c145] : memref<8x512xf32, #tpu.memory_space<vmem>>, vector<8x256xf32>
    %50 = vector.broadcast %9 : vector<1x256xf32> to vector<8x256xf32>
    %51 = arith.mulf %49, %50 : vector<8x256xf32>
    %52 = tpu.concatenate %33, %34, %37, %40, %41, %44, %47, %48, %51 in 0 : vector<8x256xf32>, vector<8x256xf32>, vector<8x256xf32>, vector<8x256xf32>, vector<8x256xf32>, vector<8x256xf32>, vector<8x256xf32>, vector<8x256xf32>, vector<8x256xf32> -> vector<72x256xf32>
    %c0_25 = arith.constant 0 : index
    %c0_26 = arith.constant 0 : index
    %53 = vector.load %arg2[%c0_25, %c0_26] : memref<8x72xf32, #tpu.memory_space<vmem>>, vector<8x72xf32>
    %cst_27 = arith.constant dense<0.000000e+00> : vector<8x256xf32>
    %54 = tpu.matmul %53, %52, %cst_27 {dimension_numbers = #tpu.dot_dimension_numbers<[1], [0], [0], [1], [0, 0, 1, 1], [], []>} : vector<8x72xf32>, vector<72x256xf32>, vector<8x256xf32> -> vector<8x256xf32>
    %c0_28 = arith.constant 0 : index
    %c0_29 = arith.constant 0 : index
    %55 = vector.load %arg3[%c0_28, %c0_29] : memref<8x1xf32, #tpu.memory_space<vmem>>, vector<8x1xf32>
    %56 = vector.broadcast %55 : vector<8x1xf32> to vector<8x256xf32>
    %57 = arith.addf %54, %56 : vector<8x256xf32>
    %c0_30 = arith.constant 0 : index
    %c128_31 = arith.constant 128 : index
    %58 = vector.load %arg18[%c0_30, %c128_31] : memref<8x512xf32, #tpu.memory_space<vmem>>, vector<8x256xf32>
    tpu.vector_store %arg18[%c0_30, %c128_31], %57 {strides = array<i32>} : memref<8x512xf32, #tpu.memory_space<vmem>>, vector<8x256xf32>,
    %c0_32 = arith.constant 0 : index
    %c77 = arith.constant 77 : index
    %59 = vector.load %arg18[%c0_32, %c77] : memref<8x512xf32, #tpu.memory_space<vmem>>, vector<8x256xf32>
    %60 = vector.broadcast %21 : vector<1x256xf32> to vector<8x256xf32>
    %61 = arith.mulf %59, %60 : vector<8x256xf32>
    %c0_33 = arith.constant 0 : index
    %c80 = arith.constant 80 : index
    %62 = vector.load %arg18[%c0_33, %c80] : memref<8x512xf32, #tpu.memory_space<vmem>>, vector<8x256xf32>
    %c0_34 = arith.constant 0 : index
    %c83 = arith.constant 83 : index
    %63 = vector.load %arg18[%c0_34, %c83] : memref<8x512xf32, #tpu.memory_space<vmem>>, vector<8x256xf32>
    %64 = vector.broadcast %17 : vector<1x256xf32> to vector<8x256xf32>
    %65 = arith.mulf %63, %64 : vector<8x256xf32>
    %c0_35 = arith.constant 0 : index
    %c125 = arith.constant 125 : index
    %66 = vector.load %arg18[%c0_35, %c125] : memref<8x512xf32, #tpu.memory_space<vmem>>, vector<8x256xf32>
    %67 = vector.broadcast %21 : vector<1x256xf32> to vector<8x256xf32>
    %68 = arith.mulf %66, %67 : vector<8x256xf32>
    %c0_36 = arith.constant 0 : index
    %c128_37 = arith.constant 128 : index
    %69 = vector.load %arg18[%c0_36, %c128_37] : memref<8x512xf32, #tpu.memory_space<vmem>>, vector<8x256xf32>
    %c0_38 = arith.constant 0 : index
    %c131 = arith.constant 131 : index
    %70 = vector.load %arg18[%c0_38, %c131] : memref<8x512xf32, #tpu.memory_space<vmem>>, vector<8x256xf32>
    %71 = vector.broadcast %17 : vector<1x256xf32> to vector<8x256xf32>
    %72 = arith.mulf %70, %71 : vector<8x256xf32>
    %c0_39 = arith.constant 0 : index
    %c173 = arith.constant 173 : index
    %73 = vector.load %arg18[%c0_39, %c173] : memref<8x512xf32, #tpu.memory_space<vmem>>, vector<8x256xf32>
    %74 = vector.broadcast %21 : vector<1x256xf32> to vector<8x256xf32>
    %75 = arith.mulf %73, %74 : vector<8x256xf32>
    %c0_40 = arith.constant 0 : index
    %c176 = arith.constant 176 : index
    %76 = vector.load %arg18[%c0_40, %c176] : memref<8x512xf32, #tpu.memory_space<vmem>>, vector<8x256xf32>
    %c0_41 = arith.constant 0 : index
    %c179 = arith.constant 179 : index
    %77 = vector.load %arg18[%c0_41, %c179] : memref<8x512xf32, #tpu.memory_space<vmem>>, vector<8x256xf32>
    %78 = vector.broadcast %17 : vector<1x256xf32> to vector<8x256xf32>
    %79 = arith.mulf %77, %78 : vector<8x256xf32>
    %80 = tpu.concatenate %61, %62, %65, %68, %69, %72, %75, %76, %79 in 0 : vector<8x256xf32>, vector<8x256xf32>, vector<8x256xf32>, vector<8x256xf32>, vector<8x256xf32>, vector<8x256xf32>, vector<8x256xf32>, vector<8x256xf32>, vector<8x256xf32> -> vector<72x256xf32>
    %c0_42 = arith.constant 0 : index
    %c0_43 = arith.constant 0 : index
    %81 = vector.load %arg4[%c0_42, %c0_43] : memref<8x72xf32, #tpu.memory_space<vmem>>, vector<8x72xf32>
    %cst_44 = arith.constant dense<0.000000e+00> : vector<8x256xf32>
    %82 = tpu.matmul %81, %80, %cst_44 {dimension_numbers = #tpu.dot_dimension_numbers<[1], [0], [0], [1], [0, 0, 1, 1], [], []>} : vector<8x72xf32>, vector<72x256xf32>, vector<8x256xf32> -> vector<8x256xf32>
    %c0_45 = arith.constant 0 : index
    %c0_46 = arith.constant 0 : index
    %83 = vector.load %arg5[%c0_45, %c0_46] : memref<8x1xf32, #tpu.memory_space<vmem>>, vector<8x1xf32>
    %84 = vector.broadcast %83 : vector<8x1xf32> to vector<8x256xf32>
    %85 = arith.addf %82, %84 : vector<8x256xf32>
    %c0_47 = arith.constant 0 : index
    %c128_48 = arith.constant 128 : index
    %86 = vector.load %arg18[%c0_47, %c128_48] : memref<8x512xf32, #tpu.memory_space<vmem>>, vector<8x256xf32>
    tpu.vector_store %arg18[%c0_47, %c128_48], %85 {strides = array<i32>} : memref<8x512xf32, #tpu.memory_space<vmem>>, vector<8x256xf32>,
    %c0_49 = arith.constant 0 : index
    %c43 = arith.constant 43 : index
    %87 = vector.load %arg18[%c0_49, %c43] : memref<8x512xf32, #tpu.memory_space<vmem>>, vector<8x256xf32>
    %88 = vector.broadcast %29 : vector<1x256xf32> to vector<8x256xf32>
    %89 = arith.mulf %87, %88 : vector<8x256xf32>
    %c0_50 = arith.constant 0 : index
    %c48 = arith.constant 48 : index
    %90 = vector.load %arg18[%c0_50, %c48] : memref<8x512xf32, #tpu.memory_space<vmem>>, vector<8x256xf32>
    %c0_51 = arith.constant 0 : index
    %c53 = arith.constant 53 : index
    %91 = vector.load %arg18[%c0_51, %c53] : memref<8x512xf32, #tpu.memory_space<vmem>>, vector<8x256xf32>
    %92 = vector.broadcast %25 : vector<1x256xf32> to vector<8x256xf32>
    %93 = arith.mulf %91, %92 : vector<8x256xf32>
    %c0_52 = arith.constant 0 : index
    %c123 = arith.constant 123 : index
    %94 = vector.load %arg18[%c0_52, %c123] : memref<8x512xf32, #tpu.memory_space<vmem>>, vector<8x256xf32>
    %95 = vector.broadcast %29 : vector<1x256xf32> to vector<8x256xf32>
    %96 = arith.mulf %94, %95 : vector<8x256xf32>
    %c0_53 = arith.constant 0 : index
    %c128_54 = arith.constant 128 : index
    %97 = vector.load %arg18[%c0_53, %c128_54] : memref<8x512xf32, #tpu.memory_space<vmem>>, vector<8x256xf32>
    %c0_55 = arith.constant 0 : index
    %c133 = arith.constant 133 : index
    %98 = vector.load %arg18[%c0_55, %c133] : memref<8x512xf32, #tpu.memory_space<vmem>>, vector<8x256xf32>
    %99 = vector.broadcast %25 : vector<1x256xf32> to vector<8x256xf32>
    %100 = arith.mulf %98, %99 : vector<8x256xf32>
    %c0_56 = arith.constant 0 : index
    %c203 = arith.constant 203 : index
    %101 = vector.load %arg18[%c0_56, %c203] : memref<8x512xf32, #tpu.memory_space<vmem>>, vector<8x256xf32>
    %102 = vector.broadcast %29 : vector<1x256xf32> to vector<8x256xf32>
    %103 = arith.mulf %101, %102 : vector<8x256xf32>
    %c0_57 = arith.constant 0 : index
    %c208 = arith.constant 208 : index
    %104 = vector.load %arg18[%c0_57, %c208] : memref<8x512xf32, #tpu.memory_space<vmem>>, vector<8x256xf32>
    %c0_58 = arith.constant 0 : index
    %c213 = arith.constant 213 : index
    %105 = vector.load %arg18[%c0_58, %c213] : memref<8x512xf32, #tpu.memory_space<vmem>>, vector<8x256xf32>
    %106 = vector.broadcast %25 : vector<1x256xf32> to vector<8x256xf32>
    %107 = arith.mulf %105, %106 : vector<8x256xf32>
    %108 = tpu.concatenate %89, %90, %93, %96, %97, %100, %103, %104, %107 in 0 : vector<8x256xf32>, vector<8x256xf32>, vector<8x256xf32>, vector<8x256xf32>, vector<8x256xf32>, vector<8x256xf32>, vector<8x256xf32>, vector<8x256xf32>, vector<8x256xf32> -> vector<72x256xf32>
    %c0_59 = arith.constant 0 : index
    %c0_60 = arith.constant 0 : index
    %109 = vector.load %arg6[%c0_59, %c0_60] : memref<8x72xf32, #tpu.memory_space<vmem>>, vector<8x72xf32>
    %cst_61 = arith.constant dense<0.000000e+00> : vector<8x256xf32>
    %110 = tpu.matmul %109, %108, %cst_61 {dimension_numbers = #tpu.dot_dimension_numbers<[1], [0], [0], [1], [0, 0, 1, 1], [], []>} : vector<8x72xf32>, vector<72x256xf32>, vector<8x256xf32> -> vector<8x256xf32>
    %c0_62 = arith.constant 0 : index
    %c0_63 = arith.constant 0 : index
    %111 = vector.load %arg7[%c0_62, %c0_63] : memref<8x1xf32, #tpu.memory_space<vmem>>, vector<8x1xf32>
    %112 = vector.broadcast %111 : vector<8x1xf32> to vector<8x256xf32>
    %113 = arith.addf %110, %112 : vector<8x256xf32>
    %cst_64 = arith.constant 0.000000e+00 : f32
    %114 = vector.broadcast %cst_64 : f32 to vector<8x256xf32>
    %115 = arith.maximumf %57, %114 : vector<8x256xf32>
    %cst_65 = arith.constant 0.000000e+00 : f32
    %116 = vector.broadcast %cst_65 : f32 to vector<8x256xf32>
    %117 = arith.maximumf %85, %116 : vector<8x256xf32>
    %118 = arith.addf %115, %117 : vector<8x256xf32>
    %cst_66 = arith.constant 0.000000e+00 : f32
    %119 = vector.broadcast %cst_66 : f32 to vector<8x256xf32>
    %120 = arith.maximumf %113, %119 : vector<8x256xf32>
    %121 = arith.addf %118, %120 : vector<8x256xf32>
    %c0_67 = arith.constant 0 : index
    %c0_68 = arith.constant 0 : index
    %122 = vector.load %arg8[%c0_67, %c0_68] : memref<8x1xf32, #tpu.memory_space<vmem>>, vector<8x1xf32>
    %123 = vector.broadcast %122 : vector<8x1xf32> to vector<8x256xf32>
    %124 = arith.mulf %121, %123 : vector<8x256xf32>
    %cst_69 = arith.constant dense<0.000000e+00> : vector<256xf32>
    %125 = vector.multi_reduction <add>, %124, %cst_69 [0] : vector<8x256xf32> to vector<256xf32>
    %126 = vector.shape_cast %125 : vector<256xf32> to vector<1x256xf32>
    %c0_70 = arith.constant 0 : index
    %c0_71 = arith.constant 0 : index
    %127 = vector.load %arg9[%c0_70, %c0_71] : memref<1x1xf32, #tpu.memory_space<vmem>>, vector<1x1xf32>
    %128 = vector.broadcast %127 : vector<1x1xf32> to vector<1x256xf32>
    %129 = arith.addf %126, %128 : vector<1x256xf32>
    %cst_72 = arith.constant 0.000000e+00 : f32
    %130 = vector.broadcast %cst_72 : f32 to vector<1x256xf32>
    %131 = arith.subf %130, %129 : vector<1x256xf32>
    %cst_73 = arith.constant 0.999994993 : f32
    %132 = vector.broadcast %cst_73 : f32 to vector<1x256xf32>
    %133 = arith.mulf %131, %132 : vector<1x256xf32>
    %134 = math.exp %133 : vector<1x256xf32>
    %cst_74 = arith.constant 1.000000e+00 : f32
    %135 = vector.broadcast %cst_74 : f32 to vector<1x256xf32>
    %136 = arith.addf %135, %134 : vector<1x256xf32>
    %cst_75 = arith.constant 1.000000e+00 : f32
    %137 = vector.broadcast %cst_75 : f32 to vector<1x256xf32>
    %138 = arith.divf %137, %136 : vector<1x256xf32>
    %c0_76 = arith.constant 0 : index
    %c128_77 = arith.constant 128 : index
    %139 = vector.load %arg18[%c0_76, %c128_77] : memref<8x512xf32, #tpu.memory_space<vmem>>, vector<1x256xf32>
    tpu.vector_store %arg18[%c0_76, %c128_77], %138 {strides = array<i32>} : memref<8x512xf32, #tpu.memory_space<vmem>>, vector<1x256xf32>,
    %c0_78 = arith.constant 0 : index
    %c111_79 = arith.constant 111 : index
    %140 = vector.load %arg18[%c0_78, %c111_79] : memref<8x512xf32, #tpu.memory_space<vmem>>, vector<1x256xf32>
    %141 = arith.mulf %140, %13 : vector<1x256xf32>
    %c0_80 = arith.constant 0 : index
    %c112_81 = arith.constant 112 : index
    %142 = vector.load %arg18[%c0_80, %c112_81] : memref<8x512xf32, #tpu.memory_space<vmem>>, vector<1x256xf32>
    %c0_82 = arith.constant 0 : index
    %c113_83 = arith.constant 113 : index
    %143 = vector.load %arg18[%c0_82, %c113_83] : memref<8x512xf32, #tpu.memory_space<vmem>>, vector<1x256xf32>
    %144 = arith.mulf %143, %9 : vector<1x256xf32>
    %c0_84 = arith.constant 0 : index
    %c127_85 = arith.constant 127 : index
    %145 = vector.load %arg18[%c0_84, %c127_85] : memref<8x512xf32, #tpu.memory_space<vmem>>, vector<1x256xf32>
    %146 = arith.mulf %145, %13 : vector<1x256xf32>
    %c0_86 = arith.constant 0 : index
    %c129_87 = arith.constant 129 : index
    %147 = vector.load %arg18[%c0_86, %c129_87] : memref<8x512xf32, #tpu.memory_space<vmem>>, vector<1x256xf32>
    %148 = arith.mulf %147, %9 : vector<1x256xf32>
    %c0_88 = arith.constant 0 : index
    %c143_89 = arith.constant 143 : index
    %149 = vector.load %arg18[%c0_88, %c143_89] : memref<8x512xf32, #tpu.memory_space<vmem>>, vector<1x256xf32>
    %150 = arith.mulf %149, %13 : vector<1x256xf32>
    %c0_90 = arith.constant 0 : index
    %c144_91 = arith.constant 144 : index
    %151 = vector.load %arg18[%c0_90, %c144_91] : memref<8x512xf32, #tpu.memory_space<vmem>>, vector<1x256xf32>
    %c0_92 = arith.constant 0 : index
    %c145_93 = arith.constant 145 : index
    %152 = vector.load %arg18[%c0_92, %c145_93] : memref<8x512xf32, #tpu.memory_space<vmem>>, vector<1x256xf32>
    %153 = arith.mulf %152, %9 : vector<1x256xf32>
    %154 = arith.addf %141, %142 : vector<1x256xf32>
    %155 = arith.addf %144, %146 : vector<1x256xf32>
    %156 = arith.addf %154, %155 : vector<1x256xf32>
    %157 = arith.addf %148, %150 : vector<1x256xf32>
    %158 = arith.addf %151, %153 : vector<1x256xf32>
    %159 = arith.addf %157, %158 : vector<1x256xf32>
    %160 = arith.addf %156, %159 : vector<1x256xf32>
    %cst_94 = arith.constant 9.000000e+00 : f32
    %161 = vector.broadcast %cst_94 : f32 to vector<1x256xf32>
    %162 = arith.mulf %161, %138 : vector<1x256xf32>
    %163 = arith.subf %162, %160 : vector<1x256xf32>
    %cst_95 = arith.constant 0.000000e+00 : f32
    %164 = vector.broadcast %cst_95 : f32 to vector<1x256xf32>
    %165 = arith.maximumf %163, %164 : vector<1x256xf32>
    %166 = vector.broadcast %165 : vector<1x256xf32> to vector<8x256xf32>
    %167 = arith.mulf %1, %166 : vector<8x256xf32>
    %c0_96 = arith.constant 0 : index
    %c0_97 = arith.constant 0 : index
    %168 = vector.load %arg10[%c0_96, %c0_97] : memref<256x256xf32, #tpu.memory_space<vmem>>, vector<256x256xf32>
    %cst_98 = arith.constant dense<0.000000e+00> : vector<8x256xf32>
    %169 = tpu.matmul %1, %168, %cst_98 {dimension_numbers = #tpu.dot_dimension_numbers<[1], [0], [0], [1], [0, 0, 1, 1], [], []>} : vector<8x256xf32>, vector<256x256xf32>, vector<8x256xf32> -> vector<8x256xf32>
    %c0_99 = arith.constant 0 : index
    %c128_100 = arith.constant 128 : index
    %170 = vector.load %arg18[%c0_99, %c128_100] : memref<8x512xf32, #tpu.memory_space<vmem>>, vector<8x256xf32>
    tpu.vector_store %arg18[%c0_99, %c128_100], %169 {strides = array<i32>} : memref<8x512xf32, #tpu.memory_space<vmem>>, vector<8x256xf32>,
    %c0_101 = arith.constant 0 : index
    %c128_102 = arith.constant 128 : index
    %171 = vector.load %arg18[%c0_101, %c128_102] : memref<8x512xf32, #tpu.memory_space<vmem>>, vector<8x256xf32>
    %c0_103 = arith.constant 0 : index
    %c129_104 = arith.constant 129 : index
    %172 = vector.load %arg18[%c0_103, %c129_104] : memref<8x512xf32, #tpu.memory_space<vmem>>, vector<8x256xf32>
    %c0_105 = arith.constant 0 : index
    %c130 = arith.constant 130 : index
    %173 = vector.load %arg18[%c0_105, %c130] : memref<8x512xf32, #tpu.memory_space<vmem>>, vector<8x256xf32>
    %c0_106 = arith.constant 0 : index
    %c144_107 = arith.constant 144 : index
    %174 = vector.load %arg18[%c0_106, %c144_107] : memref<8x512xf32, #tpu.memory_space<vmem>>, vector<8x256xf32>
    %c0_108 = arith.constant 0 : index
    %c145_109 = arith.constant 145 : index
    %175 = vector.load %arg18[%c0_108, %c145_109] : memref<8x512xf32, #tpu.memory_space<vmem>>, vector<8x256xf32>
    %c0_110 = arith.constant 0 : index
    %c146 = arith.constant 146 : index
    %176 = vector.load %arg18[%c0_110, %c146] : memref<8x512xf32, #tpu.memory_space<vmem>>, vector<8x256xf32>
    %c0_111 = arith.constant 0 : index
    %c160 = arith.constant 160 : index
    %177 = vector.load %arg18[%c0_111, %c160] : memref<8x512xf32, #tpu.memory_space<vmem>>, vector<8x256xf32>
    %c0_112 = arith.constant 0 : index
    %c161 = arith.constant 161 : index
    %178 = vector.load %arg18[%c0_112, %c161] : memref<8x512xf32, #tpu.memory_space<vmem>>, vector<8x256xf32>
    %c0_113 = arith.constant 0 : index
    %c162 = arith.constant 162 : index
    %179 = vector.load %arg18[%c0_113, %c162] : memref<8x512xf32, #tpu.memory_space<vmem>>, vector<8x256xf32>
    %180 = tpu.concatenate %171, %172, %173, %174, %175, %176, %177, %178, %179 in 0 : vector<8x256xf32>, vector<8x256xf32>, vector<8x256xf32>, vector<8x256xf32>, vector<8x256xf32>, vector<8x256xf32>, vector<8x256xf32>, vector<8x256xf32>, vector<8x256xf32> -> vector<72x256xf32>
    %c0_114 = arith.constant 0 : index
    %c0_115 = arith.constant 0 : index
    %181 = vector.load %arg11[%c0_114, %c0_115] : memref<8x72xf32, #tpu.memory_space<vmem>>, vector<8x72xf32>
    %cst_116 = arith.constant dense<0.000000e+00> : vector<8x256xf32>
    %182 = tpu.matmul %181, %180, %cst_116 {dimension_numbers = #tpu.dot_dimension_numbers<[1], [0], [0], [1], [0, 0, 1, 1], [], []>} : vector<8x72xf32>, vector<72x256xf32>, vector<8x256xf32> -> vector<8x256xf32>
    %c0_117 = arith.constant 0 : index
    %c0_118 = arith.constant 0 : index
    %183 = vector.load %arg12[%c0_117, %c0_118] : memref<8x1xf32, #tpu.memory_space<vmem>>, vector<8x1xf32>
    %184 = vector.broadcast %183 : vector<8x1xf32> to vector<8x256xf32>
    %185 = arith.addf %182, %184 : vector<8x256xf32>
    %cst_119 = arith.constant 0.999994993 : f32
    %186 = vector.broadcast %cst_119 : f32 to vector<8x256xf32>
    %187 = arith.mulf %185, %186 : vector<8x256xf32>
    %cst_120 = arith.constant 0.000000e+00 : f32
    %188 = vector.broadcast %cst_120 : f32 to vector<8x256xf32>
    %189 = arith.maximumf %187, %188 : vector<8x256xf32>
    %cst_121 = arith.constant 1.300000e+01 : f32
    %190 = vector.broadcast %cst_121 : f32 to vector<1x256xf32>
    %191 = arith.cmpf ole, %2, %190 : vector<1x256xf32>
    %192 = arith.extui %191 : vector<1x256xi1> to vector<1x256xi32>
    %193 = arith.sitofp %192 : vector<1x256xi32> to vector<1x256xf32>
    %cst_122 = arith.constant 1.300000e+01 : f32
    %194 = vector.broadcast %cst_122 : f32 to vector<1x256xf32>
    %195 = arith.cmpf ole, %3, %194 : vector<1x256xf32>
    %196 = arith.extui %195 : vector<1x256xi1> to vector<1x256xi32>
    %197 = arith.sitofp %196 : vector<1x256xi32> to vector<1x256xf32>
    %198 = arith.mulf %193, %197 : vector<1x256xf32>
    %199 = vector.broadcast %198 : vector<1x256xf32> to vector<8x256xf32>
    %200 = arith.mulf %189, %199 : vector<8x256xf32>
    %cst_123 = arith.constant dense<0xFF800000> : vector<8xf32>
    %201 = vector.multi_reduction <maximumf>, %200, %cst_123 [1] : vector<8x256xf32> to vector<8xf32>
    %202 = vector.shape_cast %201 : vector<8xf32> to vector<8x1xf32>
    %c0_124 = arith.constant 0 : index
    %c0_125 = arith.constant 0 : index
    %203 = vector.load %arg13[%c0_124, %c0_125] : memref<8x4xf32, #tpu.memory_space<vmem>>, vector<8x4xf32>
    %204 = vector.broadcast %202 : vector<8x1xf32> to vector<8x4xf32>
    %205 = arith.mulf %204, %203 : vector<8x4xf32>
    %cst_126 = arith.constant dense<0.000000e+00> : vector<4xf32>
    %206 = vector.multi_reduction <add>, %205, %cst_126 [0] : vector<8x4xf32> to vector<4xf32>
    %207 = vector.shape_cast %206 : vector<4xf32> to vector<1x4xf32>
    %cst_127 = arith.constant 0.000000e+00 : f32
    %208 = vector.broadcast %cst_127 : f32 to vector<1x4xf32>
    %209 = arith.maximumf %207, %208 : vector<1x4xf32>
    %c0_128 = arith.constant 0 : index
    %c0_129 = arith.constant 0 : index
    %210 = vector.load %arg14[%c0_128, %c0_129] : memref<8x4xf32, #tpu.memory_space<vmem>>, vector<8x4xf32>
    %211 = vector.broadcast %209 : vector<1x4xf32> to vector<8x4xf32>
    %212 = arith.mulf %210, %211 : vector<8x4xf32>
    %cst_130 = arith.constant dense<0.000000e+00> : vector<8xf32>
    %213 = vector.multi_reduction <add>, %212, %cst_130 [1] : vector<8x4xf32> to vector<8xf32>
    %214 = vector.shape_cast %213 : vector<8xf32> to vector<8x1xf32>
    %cst_131 = arith.constant 0.000000e+00 : f32
    %215 = vector.broadcast %cst_131 : f32 to vector<8x1xf32>
    %216 = arith.subf %215, %214 : vector<8x1xf32>
    %217 = math.exp %216 : vector<8x1xf32>
    %cst_132 = arith.constant 1.000000e+00 : f32
    %218 = vector.broadcast %cst_132 : f32 to vector<8x1xf32>
    %219 = arith.addf %218, %217 : vector<8x1xf32>
    %cst_133 = arith.constant 1.000000e+00 : f32
    %220 = vector.broadcast %cst_133 : f32 to vector<8x1xf32>
    %221 = arith.divf %220, %219 : vector<8x1xf32>
    %222 = arith.addf %221, %202 : vector<8x1xf32>
    %cst_134 = arith.constant 1.000000e+00 : f32
    %223 = vector.broadcast %cst_134 : f32 to vector<8x1xf32>
    %224 = arith.addf %222, %223 : vector<8x1xf32>
    %225 = vector.broadcast %224 : vector<8x1xf32> to vector<8x256xf32>
    %226 = arith.mulf %167, %225 : vector<8x256xf32>
    %c0_135 = arith.constant 0 : index
    %c0_136 = arith.constant 0 : index
    %c0_137 = arith.constant 0 : index
    %227 = vector.load %arg17[%c0_135, %c0_136, %c0_137] : memref<1x8x256xf32, #tpu.memory_space<vmem>>, vector<1x8x256xf32>
    %228 = vector.shape_cast %227 : vector<1x8x256xf32> to vector<8x256xf32>
    %229 = vector.shape_cast %226 : vector<8x256xf32> to vector<1x8x256xf32>
    tpu.vector_store %arg17[%c0_135, %c0_136, %c0_137], %229 {strides = array<i32>} : memref<1x8x256xf32, #tpu.memory_space<vmem>>, vector<1x8x256xf32>,
    return
  }
  func.func @transform_0(%arg0: i32) -> (i32, i32, i32) {
    %c0_i32 = arith.constant 0 : i32
    %c0_i32_0 = arith.constant 0 : i32
    %c0_i32_1 = arith.constant 0 : i32
    return %arg0, %c0_i32, %c0_i32_0 : i32, i32, i32
  }
  func.func @transform_1(%arg0: i32) -> (i32, i32) {
    %c0_i32 = arith.constant 0 : i32
    %c0_i32_0 = arith.constant 0 : i32
    %c0_i32_1 = arith.constant 0 : i32
    return %c0_i32, %c0_i32_0 : i32, i32
  }
  func.func @transform_2(%arg0: i32) -> (i32, i32) {
    %c0_i32 = arith.constant 0 : i32
    %c0_i32_0 = arith.constant 0 : i32
    %c0_i32_1 = arith.constant 0 : i32
    return %c0_i32, %c0_i32_0 : i32, i32
  }
  func.func @transform_3(%arg0: i32) -> (i32, i32) {
    %c0_i32 = arith.constant 0 : i32
    %c0_i32_0 = arith.constant 0 : i32
    %c0_i32_1 = arith.constant 0 : i32
    return %c0_i32, %c0_i32_0 : i32, i32
  }
  func.func @transform_4(%arg0: i32) -> (i32, i32) {
    %c0_i32 = arith.constant 0 : i32
    %c0_i32_0 = arith.constant 0 : i32
    %c0_i32_1 = arith.constant 0 : i32
    return %c0_i32, %c0_i32_0 : i32, i32
  }
  func.func @transform_5(%arg0: i32) -> (i32, i32) {
    %c0_i32 = arith.constant 0 : i32
    %c0_i32_0 = arith.constant 0 : i32
    %c0_i32_1 = arith.constant 0 : i32
    return %c0_i32, %c0_i32_0 : i32, i32
  }
  func.func @transform_6(%arg0: i32) -> (i32, i32) {
    %c0_i32 = arith.constant 0 : i32
    %c0_i32_0 = arith.constant 0 : i32
    %c0_i32_1 = arith.constant 0 : i32
    return %c0_i32, %c0_i32_0 : i32, i32
  }
  func.func @transform_7(%arg0: i32) -> (i32, i32) {
    %c0_i32 = arith.constant 0 : i32
    %c0_i32_0 = arith.constant 0 : i32
    %c0_i32_1 = arith.constant 0 : i32
    return %c0_i32, %c0_i32_0 : i32, i32
  }
  func.func @transform_8(%arg0: i32) -> (i32, i32) {
    %c0_i32 = arith.constant 0 : i32
    %c0_i32_0 = arith.constant 0 : i32
    %c0_i32_1 = arith.constant 0 : i32
    return %c0_i32, %c0_i32_0 : i32, i32
  }
  func.func @transform_9(%arg0: i32) -> (i32, i32) {
    %c0_i32 = arith.constant 0 : i32
    %c0_i32_0 = arith.constant 0 : i32
    %c0_i32_1 = arith.constant 0 : i32
    return %c0_i32, %c0_i32_0 : i32, i32
  }
  func.func @transform_10(%arg0: i32) -> (i32, i32) {
    %c0_i32 = arith.constant 0 : i32
    %c0_i32_0 = arith.constant 0 : i32
    %c0_i32_1 = arith.constant 0 : i32
    return %c0_i32, %c0_i32_0 : i32, i32
  }
  func.func @transform_11(%arg0: i32) -> (i32, i32) {
    %c0_i32 = arith.constant 0 : i32
    %c0_i32_0 = arith.constant 0 : i32
    %c0_i32_1 = arith.constant 0 : i32
    return %c0_i32, %c0_i32_0 : i32, i32
  }
  func.func @transform_12(%arg0: i32) -> (i32, i32) {
    %c0_i32 = arith.constant 0 : i32
    %c0_i32_0 = arith.constant 0 : i32
    %c0_i32_1 = arith.constant 0 : i32
    return %c0_i32, %c0_i32_0 : i32, i32
  }
  func.func @transform_13(%arg0: i32) -> (i32, i32) {
    %c0_i32 = arith.constant 0 : i32
    %c0_i32_0 = arith.constant 0 : i32
    %c0_i32_1 = arith.constant 0 : i32
    return %c0_i32, %c0_i32_0 : i32, i32
  }
  func.func @transform_14(%arg0: i32) -> (i32, i32) {
    %c0_i32 = arith.constant 0 : i32
    %c0_i32_0 = arith.constant 0 : i32
    %c0_i32_1 = arith.constant 0 : i32
    return %c0_i32, %c0_i32_0 : i32, i32
  }
  func.func @transform_15(%arg0: i32) -> (i32, i32) {
    %c0_i32 = arith.constant 0 : i32
    %c0_i32_0 = arith.constant 0 : i32
    %c0_i32_1 = arith.constant 0 : i32
    return %c0_i32, %c0_i32_0 : i32, i32
  }
  func.func @transform_16(%arg0: i32) -> (i32, i32, i32) {
    %c0_i32 = arith.constant 0 : i32
    %c0_i32_0 = arith.constant 0 : i32
    %c0_i32_1 = arith.constant 0 : i32
    return %arg0, %c0_i32, %c0_i32_0 : i32, i32, i32
  }
}

</mosaic_0001>

<llo_original>
// kernel: local_freattention_forward.1
$region0: #{local_freattention_forward.1}
  #allocation0 [shape = 'u32[]', space=smem, size = 0x4, offset = 0x4, fixed_abs, tag = 'smem constant byte address 0x4 - core index']
  #allocation1 [shape = 'u32[144,128]{1,0:T(1,128)}', space=vmem, size = 0x12000, scoped, tag = 'internal scratch']
  #allocation2 [shape = 'f32[8,512]{1,0:T(8,128)}', space=vmem, size = 0x4000, scoped, tag = 'scratch operand']
  #allocation3 [shape = 'f32[1,1]{1,0:T(1,128)S(1)}', space=vmem, size = 0x200, scoped, tag = 'scoped memory for local_freattention_forward.1']
  %s0 = inlined_call_operand.vmem [shape: f32[2,8,256], index: 0, kind: input, shape index: {}]
  %s1 = inlined_call_operand.vmem [shape: f32[8,72], index: 1, kind: input, shape index: {}]
  %s2 = inlined_call_operand.vmem [shape: f32[8,1], index: 2, kind: input, shape index: {}]
  %s3 = inlined_call_operand.vmem [shape: f32[8,72], index: 3, kind: input, shape index: {}]
  %s4 = inlined_call_operand.vmem [shape: f32[8,1], index: 4, kind: input, shape index: {}]
  %s5 = inlined_call_operand.vmem [shape: f32[8,72], index: 5, kind: input, shape index: {}]
  %s6 = inlined_call_operand.vmem [shape: f32[8,1], index: 6, kind: input, shape index: {}]
  %s7 = inlined_call_operand.vmem [shape: f32[8,1], index: 7, kind: input, shape index: {}]
  %s8 = inlined_call_operand.<no memory space> [shape: f32[1,1], index: 8, kind: input, shape index: {}]
  %s9 = inlined_call_operand.vmem [shape: f32[256,256], index: 9, kind: input, shape index: {}]
  %s10 = inlined_call_operand.vmem [shape: f32[8,72], index: 10, kind: input, shape index: {}]
  %s11 = inlined_call_operand.vmem [shape: f32[8,1], index: 11, kind: input, shape index: {}]
  %s12 = inlined_call_operand.vmem [shape: f32[8,4], index: 12, kind: input, shape index: {}]
  %s13 = inlined_call_operand.vmem [shape: f32[8,4], index: 13, kind: input, shape index: {}]
  %s14 = inlined_call_operand.vmem [shape: f32[1,256], index: 14, kind: input, shape index: {}]
  %s15 = inlined_call_operand.vmem [shape: f32[1,256], index: 15, kind: input, shape index: {}]
  %s16 = inlined_call_operand.vmem [shape: f32[2,8,256], index: 16, kind: output, shape index: {}]
  %s17 = sld [smem:[#allocation0]]
  $region97: #{local_freattention_forward.1} parent=0
    _
  %s19 = ssub.s32 1, %s17
  %s20 = scalar_select 0, %s19, %s17
  %v21 = vstv %s8
  %22 = vst [vmem:[#allocation3] sm:$0x1] %v21
  loop: start=0, step=1, limit=4
  $region2: #{local_freattention_forward.1} parent=0 // loop_pre_header
    _
  $region3: #{local_freattention_forward.1} parent=0 // loop_header
    %s24 = sphi 0, %s28
    %p25 = scmp.ge.s32.totalorder %s24, 4
    %s34 = sphi 0, %s36
    %s37 = sphi 0, %s34
    %s38 = sphi 0, %s37
    %s54 = sphi 0, %s38
    %s58 = sphi 0, %s58
    %s60 = sphi 0, %s58
    %s61 = sphi 0, %s60
    %s75 = sphi 0, %s61
    %s79 = sphi 0, %s79
    %s81 = sphi 0, %s79
    %s82 = sphi 0, %s81
    %s96 = sphi 0, %s82
    %s100 = sphi 0, %s100
    %s102 = sphi 0, %s100
    %s103 = sphi 0, %s102
    %s117 = sphi 0, %s103
    %s121 = sphi 0, %s121
    %s123 = sphi 0, %s121
    %s124 = sphi 0, %s123
    %s138 = sphi 0, %s124
    %s142 = sphi 0, %s142
    %s144 = sphi 0, %s142
    %s145 = sphi 0, %s144
    %s159 = sphi 0, %s145
    %s163 = sphi 0, %s163
    %s165 = sphi 0, %s163
    %s166 = sphi 0, %s165
    %s180 = sphi 0, %s166
    %s184 = sphi 0, %s184
    %s186 = sphi 0, %s184
    %s187 = sphi 0, %s186
    %s201 = sphi 0, %s187
    %s205 = sphi 0, %s205
    %s207 = sphi 0, %s205
    %s208 = sphi 0, %s207
    %s222 = sphi 0, %s208
    %s226 = sphi 0, %s226
    %s228 = sphi 0, %s226
    %s229 = sphi 0, %s228
    %s243 = sphi 0, %s229
    %s247 = sphi 0, %s247
    %s249 = sphi 0, %s247
    %s250 = sphi 0, %s249
    %s264 = sphi 0, %s250
    %s268 = sphi 0, %s268
    %s270 = sphi 0, %s268
    %s271 = sphi 0, %s270
    %s285 = sphi 0, %s271
    %s289 = sphi 0, %s289
    %s291 = sphi 0, %s289
    %s292 = sphi 0, %s291
    %s306 = sphi 0, %s292
    %s310 = sphi 0, %s310
    %s312 = sphi 0, %s310
    %s313 = sphi 0, %s312
    %s327 = sphi 0, %s313
    %s331 = sphi 0, %s331
    %s333 = sphi 0, %s331
    %s334 = sphi 0, %s333
    %s348 = sphi 0, %s334
    %s352 = sphi 0, %s352
    %s354 = sphi 0, %s352
    %s355 = sphi 0, %s354
    %s369 = sphi 0, %s355
    %s375 = sphi 0, %s377
    %s378 = sphi 0, %s375
    %s379 = sphi 0, %s378
    %s395 = sphi 0, %s379
  $region4: #{local_freattention_forward.1} parent=0 // loop_header_branch
    %27 = sbr.rel (%p25) target = $region8
  $region5: #{local_freattention_forward.1} parent=0 // loop_body
    %s29 = ssub.s32 %s24, 1
    %s30 = ssub.s32 %s24, 2
    %s31 = sadd.s32 %s24, 1
    %s32 = ssub.s32 %s24, %s31
    %p33 = scmp.eq.s32.totalorder %s32, 0
    %s35 = sadd.s32 %s34, 1
    %s36 = scalar_select %p33, %s34, %s35
    %p39 = pneg %p33
    %p40 = scmp.eq.s32.totalorder %s24, 1
    %p41 = por %p39, %p40
    %p42 = scmp.ne.s32.totalorder %s34, %s37
    %p43 = scmp.eq.s32.totalorder %s24, 0
    %p44 = por %p42, %p43
    %p45 = scmp.ne.s32.totalorder %s34, %s37
    %p46 = scmp.eq.s32.totalorder %s29, 1
    %p47 = por %p45, %p46
    %p48 = scmp.ne.s32.totalorder %s37, %s38
    %p49 = scmp.eq.s32.totalorder %s29, 0
    %p50 = por %p48, %p49
    %p51 = scmp.ne.s32.totalorder %s37, %s38
    %p52 = scmp.eq.s32.totalorder %s30, 1
    %p53 = por %p51, %p52
    %p55 = scmp.ne.s32.totalorder %s38, %s54
    %p56 = scmp.eq.s32.totalorder %s30, 0
    %p57 = por %p55, %p56
    %s59 = sadd.s32 %s58, 1
    %p62 = scmp.eq.s32.totalorder %s24, 1
    %p63 = scmp.ne.s32.totalorder %s58, %s60
    %p64 = scmp.eq.s32.totalorder %s24, 0
    %p65 = por %p63, %p64
    %p66 = scmp.ne.s32.totalorder %s58, %s60
    %p67 = scmp.eq.s32.totalorder %s29, 1
    %p68 = por %p66, %p67
    %p69 = scmp.ne.s32.totalorder %s60, %s61
    %p70 = scmp.eq.s32.totalorder %s29, 0
    %p71 = por %p69, %p70
    %p72 = scmp.ne.s32.totalorder %s60, %s61
    %p73 = scmp.eq.s32.totalorder %s30, 1
    %p74 = por %p72, %p73
    %p76 = scmp.ne.s32.totalorder %s61, %s75
    %p77 = scmp.eq.s32.totalorder %s30, 0
    %p78 = por %p76, %p77
    %s80 = sadd.s32 %s79, 1
    %p83 = scmp.eq.s32.totalorder %s24, 1
    %p84 = scmp.ne.s32.totalorder %s79, %s81
    %p85 = scmp.eq.s32.totalorder %s24, 0
    %p86 = por %p84, %p85
    %p87 = scmp.ne.s32.totalorder %s79, %s81
    %p88 = scmp.eq.s32.totalorder %s29, 1
    %p89 = por %p87, %p88
    %p90 = scmp.ne.s32.totalorder %s81, %s82
    %p91 = scmp.eq.s32.totalorder %s29, 0
    %p92 = por %p90, %p91
    %p93 = scmp.ne.s32.totalorder %s81, %s82
    %p94 = scmp.eq.s32.totalorder %s30, 1
    %p95 = por %p93, %p94
    %p97 = scmp.ne.s32.totalorder %s82, %s96
    %p98 = scmp.eq.s32.totalorder %s30, 0
    %p99 = por %p97, %p98
    %s101 = sadd.s32 %s100, 1
    %p104 = scmp.eq.s32.totalorder %s24, 1
    %p105 = scmp.ne.s32.totalorder %s100, %s102
    %p106 = scmp.eq.s32.totalorder %s24, 0
    %p107 = por %p105, %p106
    %p108 = scmp.ne.s32.totalorder %s100, %s102
    %p109 = scmp.eq.s32.totalorder %s29, 1
    %p110 = por %p108, %p109
    %p111 = scmp.ne.s32.totalorder %s102, %s103
    %p112 = scmp.eq.s32.totalorder %s29, 0
    %p113 = por %p111, %p112
    %p114 = scmp.ne.s32.totalorder %s102, %s103
    %p115 = scmp.eq.s32.totalorder %s30, 1
    %p116 = por %p114, %p115
    %p118 = scmp.ne.s32.totalorder %s103, %s117
    %p119 = scmp.eq.s32.totalorder %s30, 0
    %p120 = por %p118, %p119
    %s122 = sadd.s32 %s121, 1
    %p125 = scmp.eq.s32.totalorder %s24, 1
    %p126 = scmp.ne.s32.totalorder %s121, %s123
    %p127 = scmp.eq.s32.totalorder %s24, 0
    %p128 = por %p126, %p127
    %p129 = scmp.ne.s32.totalorder %s121, %s123
    %p130 = scmp.eq.s32.totalorder %s29, 1
    %p131 = por %p129, %p130
    %p132 = scmp.ne.s32.totalorder %s123, %s124
    %p133 = scmp.eq.s32.totalorder %s29, 0
    %p134 = por %p132, %p133
    %p135 = scmp.ne.s32.totalorder %s123, %s124
    %p136 = scmp.eq.s32.totalorder %s30, 1
    %p137 = por %p135, %p136
    %p139 = scmp.ne.s32.totalorder %s124, %s138
    %p140 = scmp.eq.s32.totalorder %s30, 0
    %p141 = por %p139, %p140
    %s143 = sadd.s32 %s142, 1
    %p146 = scmp.eq.s32.totalorder %s24, 1
    %p147 = scmp.ne.s32.totalorder %s142, %s144
    %p148 = scmp.eq.s32.totalorder %s24, 0
    %p149 = por %p147, %p148
    %p150 = scmp.ne.s32.totalorder %s142, %s144
    %p151 = scmp.eq.s32.totalorder %s29, 1
    %p152 = por %p150, %p151
    %p153 = scmp.ne.s32.totalorder %s144, %s145
    %p154 = scmp.eq.s32.totalorder %s29, 0
    %p155 = por %p153, %p154
    %p156 = scmp.ne.s32.totalorder %s144, %s145
    %p157 = scmp.eq.s32.totalorder %s30, 1
    %p158 = por %p156, %p157
    %p160 = scmp.ne.s32.totalorder %s145, %s159
    %p161 = scmp.eq.s32.totalorder %s30, 0
    %p162 = por %p160, %p161
    %s164 = sadd.s32 %s163, 1
    %p167 = scmp.eq.s32.totalorder %s24, 1
    %p168 = scmp.ne.s32.totalorder %s163, %s165
    %p169 = scmp.eq.s32.totalorder %s24, 0
    %p170 = por %p168, %p169
    %p171 = scmp.ne.s32.totalorder %s163, %s165
    %p172 = scmp.eq.s32.totalorder %s29, 1
    %p173 = por %p171, %p172
    %p174 = scmp.ne.s32.totalorder %s165, %s166
    %p175 = scmp.eq.s32.totalorder %s29, 0
    %p176 = por %p174, %p175
    %p177 = scmp.ne.s32.totalorder %s165, %s166
    %p178 = scmp.eq.s32.totalorder %s30, 1
    %p179 = por %p177, %p178
    %p181 = scmp.ne.s32.totalorder %s166, %s180
    %p182 = scmp.eq.s32.totalorder %s30, 0
    %p183 = por %p181, %p182
    %s185 = sadd.s32 %s184, 1
    %p188 = scmp.eq.s32.totalorder %s24, 1
    %p189 = scmp.ne.s32.totalorder %s184, %s186
    %p190 = scmp.eq.s32.totalorder %s24, 0
    %p191 = por %p189, %p190
    %p192 = scmp.ne.s32.totalorder %s184, %s186
    %p193 = scmp.eq.s32.totalorder %s29, 1
    %p194 = por %p192, %p193
    %p195 = scmp.ne.s32.totalorder %s186, %s187
    %p196 = scmp.eq.s32.totalorder %s29, 0
    %p197 = por %p195, %p196
    %p198 = scmp.ne.s32.totalorder %s186, %s187
    %p199 = scmp.eq.s32.totalorder %s30, 1
    %p200 = por %p198, %p199
    %p202 = scmp.ne.s32.totalorder %s187, %s201
    %p203 = scmp.eq.s32.totalorder %s30, 0
    %p204 = por %p202, %p203
    %s206 = sadd.s32 %s205, 1
    %p209 = scmp.eq.s32.totalorder %s24, 1
    %p210 = scmp.ne.s32.totalorder %s205, %s207
    %p211 = scmp.eq.s32.totalorder %s24, 0
    %p212 = por %p210, %p211
    %p213 = scmp.ne.s32.totalorder %s205, %s207
    %p214 = scmp.eq.s32.totalorder %s29, 1
    %p215 = por %p213, %p214
    %p216 = scmp.ne.s32.totalorder %s207, %s208
    %p217 = scmp.eq.s32.totalorder %s29, 0
    %p218 = por %p216, %p217
    %p219 = scmp.ne.s32.totalorder %s207, %s208
    %p220 = scmp.eq.s32.totalorder %s30, 1
    %p221 = por %p219, %p220
    %p223 = scmp.ne.s32.totalorder %s208, %s222
    %p224 = scmp.eq.s32.totalorder %s30, 0
    %p225 = por %p223, %p224
    %s227 = sadd.s32 %s226, 1
    %p230 = scmp.eq.s32.totalorder %s24, 1
    %p231 = scmp.ne.s32.totalorder %s226, %s228
    %p232 = scmp.eq.s32.totalorder %s24, 0
    %p233 = por %p231, %p232
    %p234 = scmp.ne.s32.totalorder %s226, %s228
    %p235 = scmp.eq.s32.totalorder %s29, 1
    %p236 = por %p234, %p235
    %p237 = scmp.ne.s32.totalorder %s228, %s229
    %p238 = scmp.eq.s32.totalorder %s29, 0
    %p239 = por %p237, %p238
    %p240 = scmp.ne.s32.totalorder %s228, %s229
    %p241 = scmp.eq.s32.totalorder %s30, 1
    %p242 = por %p240, %p241
    %p244 = scmp.ne.s32.totalorder %s229, %s243
    %p245 = scmp.eq.s32.totalorder %s30, 0
    %p246 = por %p244, %p245
    %s248 = sadd.s32 %s247, 1
    %p251 = scmp.eq.s32.totalorder %s24, 1
    %p252 = scmp.ne.s32.totalorder %s247, %s249
    %p253 = scmp.eq.s32.totalorder %s24, 0
    %p254 = por %p252, %p253
    %p255 = scmp.ne.s32.totalorder %s247, %s249
    %p256 = scmp.eq.s32.totalorder %s29, 1
    %p257 = por %p255, %p256
    %p258 = scmp.ne.s32.totalorder %s249, %s250
    %p259 = scmp.eq.s32.totalorder %s29, 0
    %p260 = por %p258, %p259
    %p261 = scmp.ne.s32.totalorder %s249, %s250
    %p262 = scmp.eq.s32.totalorder %s30, 1
    %p263 = por %p261, %p262
    %p265 = scmp.ne.s32.totalorder %s250, %s264
    %p266 = scmp.eq.s32.totalorder %s30, 0
    %p267 = por %p265, %p266
    %s269 = sadd.s32 %s268, 1
    %p272 = scmp.eq.s32.totalorder %s24, 1
    %p273 = scmp.ne.s32.totalorder %s268, %s270
    %p274 = scmp.eq.s32.totalorder %s24, 0
    %p275 = por %p273, %p274
    %p276 = scmp.ne.s32.totalorder %s268, %s270
    %p277 = scmp.eq.s32.totalorder %s29, 1
    %p278 = por %p276, %p277
    %p279 = scmp.ne.s32.totalorder %s270, %s271
    %p280 = scmp.eq.s32.totalorder %s29, 0
    %p281 = por %p279, %p280
    %p282 = scmp.ne.s32.totalorder %s270, %s271
    %p283 = scmp.eq.s32.totalorder %s30, 1
    %p284 = por %p282, %p283
    %p286 = scmp.ne.s32.totalorder %s271, %s285
    %p287 = scmp.eq.s32.totalorder %s30, 0
    %p288 = por %p286, %p287
    %s290 = sadd.s32 %s289, 1
    %p293 = scmp.eq.s32.totalorder %s24, 1
    %p294 = scmp.ne.s32.totalorder %s289, %s291
    %p295 = scmp.eq.s32.totalorder %s24, 0
    %p296 = por %p294, %p295
    %p297 = scmp.ne.s32.totalorder %s289, %s291
    %p298 = scmp.eq.s32.totalorder %s29, 1
    %p299 = por %p297, %p298
    %p300 = scmp.ne.s32.totalorder %s291, %s292
    %p301 = scmp.eq.s32.totalorder %s29, 0
    %p302 = por %p300, %p301
    %p303 = scmp.ne.s32.totalorder %s291, %s292
    %p304 = scmp.eq.s32.totalorder %s30, 1
    %p305 = por %p303, %p304
    %p307 = scmp.ne.s32.totalorder %s292, %s306
    %p308 = scmp.eq.s32.totalorder %s30, 0
    %p309 = por %p307, %p308
    %s311 = sadd.s32 %s310, 1
    %p314 = scmp.eq.s32.totalorder %s24, 1
    %p315 = scmp.ne.s32.totalorder %s310, %s312
    %p316 = scmp.eq.s32.totalorder %s24, 0
    %p317 = por %p315, %p316
    %p318 = scmp.ne.s32.totalorder %s310, %s312
    %p319 = scmp.eq.s32.totalorder %s29, 1
    %p320 = por %p318, %p319
    %p321 = scmp.ne.s32.totalorder %s312, %s313
    %p322 = scmp.eq.s32.totalorder %s29, 0
    %p323 = por %p321, %p322
    %p324 = scmp.ne.s32.totalorder %s312, %s313
    %p325 = scmp.eq.s32.totalorder %s30, 1
    %p326 = por %p324, %p325
    %p328 = scmp.ne.s32.totalorder %s313, %s327
    %p329 = scmp.eq.s32.totalorder %s30, 0
    %p330 = por %p328, %p329
    %s332 = sadd.s32 %s331, 1
    %p335 = scmp.eq.s32.totalorder %s24, 1
    %p336 = scmp.ne.s32.totalorder %s331, %s333
    %p337 = scmp.eq.s32.totalorder %s24, 0
    %p338 = por %p336, %p337
    %p339 = scmp.ne.s32.totalorder %s331, %s333
    %p340 = scmp.eq.s32.totalorder %s29, 1
    %p341 = por %p339, %p340
    %p342 = scmp.ne.s32.totalorder %s333, %s334
    %p343 = scmp.eq.s32.totalorder %s29, 0
    %p344 = por %p342, %p343
    %p345 = scmp.ne.s32.totalorder %s333, %s334
    %p346 = scmp.eq.s32.totalorder %s30, 1
    %p347 = por %p345, %p346
    %p349 = scmp.ne.s32.totalorder %s334, %s348
    %p350 = scmp.eq.s32.totalorder %s30, 0
    %p351 = por %p349, %p350
    %s353 = sadd.s32 %s352, 1
    %p356 = scmp.eq.s32.totalorder %s24, 1
    %p357 = scmp.ne.s32.totalorder %s352, %s354
    %p358 = scmp.eq.s32.totalorder %s24, 0
    %p359 = por %p357, %p358
    %p360 = scmp.ne.s32.totalorder %s352, %s354
    %p361 = scmp.eq.s32.totalorder %s29, 1
    %p362 = por %p360, %p361
    %p363 = scmp.ne.s32.totalorder %s354, %s355
    %p364 = scmp.eq.s32.totalorder %s29, 0
    %p365 = por %p363, %p364
    %p366 = scmp.ne.s32.totalorder %s354, %s355
    %p367 = scmp.eq.s32.totalorder %s30, 1
    %p368 = por %p366, %p367
    %p370 = scmp.ne.s32.totalorder %s355, %s369
    %p371 = scmp.eq.s32.totalorder %s30, 0
    %p372 = por %p370, %p371
    %s373 = ssub.s32 %s24, %s31
    %p374 = scmp.eq.s32.totalorder %s373, 0
    %s376 = sadd.s32 %s375, 1
    %s377 = scalar_select %p374, %s375, %s376
    %p380 = pneg %p374
    %p381 = scmp.eq.s32.totalorder %s24, 1
    %p382 = por %p380, %p381
    %p383 = scmp.ne.s32.totalorder %s375, %s378
    %p384 = scmp.eq.s32.totalorder %s24, 0
    %p385 = por %p383, %p384
    %p386 = scmp.ne.s32.totalorder %s375, %s378
    %p387 = scmp.eq.s32.totalorder %s29, 1
    %p388 = por %p386, %p387
    %p389 = scmp.ne.s32.totalorder %s378, %s379
    %p390 = scmp.eq.s32.totalorder %s29, 0
    %p391 = por %p389, %p390
    %p392 = scmp.ne.s32.totalorder %s378, %s379
    %p393 = scmp.eq.s32.totalorder %s30, 1
    %p394 = por %p392, %p393
    %p396 = scmp.ne.s32.totalorder %s379, %s395
    %p397 = scmp.eq.s32.totalorder %s30, 0
    %p398 = por %p396, %p397
    %p399 = scmp.le.s32.totalorder 1, %s24
    %p400 = scmp.lt.s32.totalorder %s24, 3
    %p401 = pnand %p399, %p400
    %p402 = pneg %p401
    // Predicated region
    $region9: #{local_freattention_forward.1} parent=5 // pred_check
      _
    $region10: #{local_freattention_forward.1} parent=5 // pred_check_branch
      %404 = sbr.rel (%p401) target = $region12
    $region11: #{local_freattention_forward.1} parent=5 // pred_region
      %s405 = ssub.s32 %s24, 1
      // Predicated region
      $region13: #{local_freattention_forward.1} parent=11 // pred_check
        %p406 = pneg %p71
      $region14: #{local_freattention_forward.1} parent=11 // pred_check_branch
        %408 = sbr.rel (%p406) target = $region16
      $region15: #{local_freattention_forward.1} parent=11 // pred_region
        _
      $region16: #{local_freattention_forward.1} parent=11 // pred_fallthru
        _
      // Predicated region
      $region17: #{local_freattention_forward.1} parent=11 // pred_check
        %p409 = pneg %p92
      $region18: #{local_freattention_forward.1} parent=11 // pred_check_branch
        %411 = sbr.rel (%p409) target = $region20
      $region19: #{local_freattention_forward.1} parent=11 // pred_region
        _
      $region20: #{local_freattention_forward.1} parent=11 // pred_fallthru
        _
      // Predicated region
      $region21: #{local_freattention_forward.1} parent=11 // pred_check
        %p412 = pneg %p113
      $region22: #{local_freattention_forward.1} parent=11 // pred_check_branch
        %414 = sbr.rel (%p412) target = $region24
      $region23: #{local_freattention_forward.1} parent=11 // pred_region
        _
      $region24: #{local_freattention_forward.1} parent=11 // pred_fallthru
        _
      // Predicated region
      $region25: #{local_freattention_forward.1} parent=11 // pred_check
        %p415 = pneg %p134
      $region26: #{local_freattention_forward.1} parent=11 // pred_check_branch
        %417 = sbr.rel (%p415) target = $region28
      $region27: #{local_freattention_forward.1} parent=11 // pred_region
        _
      $region28: #{local_freattention_forward.1} parent=11 // pred_fallthru
        _
      // Predicated region
      $region29: #{local_freattention_forward.1} parent=11 // pred_check
        %p418 = pneg %p155
      $region30: #{local_freattention_forward.1} parent=11 // pred_check_branch
        %420 = sbr.rel (%p418) target = $region32
      $region31: #{local_freattention_forward.1} parent=11 // pred_region
        _
      $region32: #{local_freattention_forward.1} parent=11 // pred_fallthru
        _
      // Predicated region
      $region33: #{local_freattention_forward.1} parent=11 // pred_check
        %p421 = pneg %p176
      $region34: #{local_freattention_forward.1} parent=11 // pred_check_branch
        %423 = sbr.rel (%p421) target = $region36
      $region35: #{local_freattention_forward.1} parent=11 // pred_region
        _
      $region36: #{local_freattention_forward.1} parent=11 // pred_fallthru
        _
      // Predicated region
      $region37: #{local_freattention_forward.1} parent=11 // pred_check
        %p424 = pneg %p197
      $region38: #{local_freattention_forward.1} parent=11 // pred_check_branch
        %426 = sbr.rel (%p424) target = $region40
      $region39: #{local_freattention_forward.1} parent=11 // pred_region
        _
      $region40: #{local_freattention_forward.1} parent=11 // pred_fallthru
        _
      // Predicated region
      $region41: #{local_freattention_forward.1} parent=11 // pred_check
        %p427 = pneg %p218
      $region42: #{local_freattention_forward.1} parent=11 // pred_check_branch
        %429 = sbr.rel (%p427) target = $region44
      $region43: #{local_freattention_forward.1} parent=11 // pred_region
        _
      $region44: #{local_freattention_forward.1} parent=11 // pred_fallthru
        _
      // Predicated region
      $region45: #{local_freattention_forward.1} parent=11 // pred_check
        %p430 = pneg %p239
      $region46: #{local_freattention_forward.1} parent=11 // pred_check_branch
        %432 = sbr.rel (%p430) target = $region48
      $region47: #{local_freattention_forward.1} parent=11 // pred_region
        _
      $region48: #{local_freattention_forward.1} parent=11 // pred_fallthru
        _
      // Predicated region
      $region49: #{local_freattention_forward.1} parent=11 // pred_check
        %p433 = pneg %p260
      $region50: #{local_freattention_forward.1} parent=11 // pred_check_branch
        %435 = sbr.rel (%p433) target = $region52
      $region51: #{local_freattention_forward.1} parent=11 // pred_region
        _
      $region52: #{local_freattention_forward.1} parent=11 // pred_fallthru
        _
      // Predicated region
      $region53: #{local_freattention_forward.1} parent=11 // pred_check
        %p436 = pneg %p281
      $region54: #{local_freattention_forward.1} parent=11 // pred_check_branch
        %438 = sbr.rel (%p436) target = $region56
      $region55: #{local_freattention_forward.1} parent=11 // pred_region
        _
      $region56: #{local_freattention_forward.1} parent=11 // pred_fallthru
        _
      // Predicated region
      $region57: #{local_freattention_forward.1} parent=11 // pred_check
        %p439 = pneg %p302
      $region58: #{local_freattention_forward.1} parent=11 // pred_check_branch
        %441 = sbr.rel (%p439) target = $region60
      $region59: #{local_freattention_forward.1} parent=11 // pred_region
        _
      $region60: #{local_freattention_forward.1} parent=11 // pred_fallthru
        _
      // Predicated region
      $region61: #{local_freattention_forward.1} parent=11 // pred_check
        %p442 = pneg %p323
      $region62: #{local_freattention_forward.1} parent=11 // pred_check_branch
        %444 = sbr.rel (%p442) target = $region64
      $region63: #{local_freattention_forward.1} parent=11 // pred_region
        _
      $region64: #{local_freattention_forward.1} parent=11 // pred_fallthru
        _
      // Predicated region
      $region65: #{local_freattention_forward.1} parent=11 // pred_check
        %p445 = pneg %p344
      $region66: #{local_freattention_forward.1} parent=11 // pred_check_branch
        %447 = sbr.rel (%p445) target = $region68
      $region67: #{local_freattention_forward.1} parent=11 // pred_region
        _
      $region68: #{local_freattention_forward.1} parent=11 // pred_fallthru
        _
      // Predicated region
      $region69: #{local_freattention_forward.1} parent=11 // pred_check
        %p448 = pneg %p365
      $region70: #{local_freattention_forward.1} parent=11 // pred_check_branch
        %450 = sbr.rel (%p448) target = $region72
      $region71: #{local_freattention_forward.1} parent=11 // pred_region
        _
      $region72: #{local_freattention_forward.1} parent=11 // pred_fallthru
        _
    $region12: #{local_freattention_forward.1} parent=5 // pred_fallthru
      _
    %p451 = scmp.lt.s32.totalorder %s24, 2
    // Predicated region
    $region73: #{local_freattention_forward.1} parent=5 // pred_check
      %p452 = pneg %p451
    $region74: #{local_freattention_forward.1} parent=5 // pred_check_branch
      %454 = sbr.rel (%p452) target = $region76
    $region75: #{local_freattention_forward.1} parent=5 // pred_region
      // Predicated region
      $region77: #{local_freattention_forward.1} parent=75 // pred_check
        %p455 = pneg %p44
      $region78: #{local_freattention_forward.1} parent=75 // pred_check_branch
        %457 = sbr.rel (%p455) target = $region80
      $region79: #{local_freattention_forward.1} parent=75 // pred_region
        %p458 = scmp.lt.s32.totalorder %s24, 1
        %s459 = scalar_select %p458, %s24, 1
        %s460 = smul.addr %s459, 2
        %s461 = smul.addr %s460, 8
        %s462 = scalar_lea.vmem %s0, %s461
      $region80: #{local_freattention_forward.1} parent=75 // pred_fallthru
        _
    $region76: #{local_freattention_forward.1} parent=5 // pred_fallthru
      _
    %p463 = scmp.le.s32.totalorder 1, %s24
    %p464 = scmp.lt.s32.totalorder %s24, 3
    %p465 = pnand %p463, %p464
    %p466 = pneg %p465
    // Predicated region
    $region81: #{local_freattention_forward.1} parent=5 // pred_check
      _
    $region82: #{local_freattention_forward.1} parent=5 // pred_check_branch
      %468 = sbr.rel (%p465) target = $region84
    $region83: #{local_freattention_forward.1} parent=5 // pred_region
      %s469 = ssub.s32 %s24, 1
      %p470 = scmp.lt.s32.totalorder %s29, 1
      %s471 = scalar_select %p470, %s29, 1
      %s472 = smul.addr %s471, 2
      %s473 = smul.addr %s472, 8
      %s474 = scalar_lea.vmem %s0, %s473
      %p475 = pneg %p50
      %p476 = pneg %p47
      %p477 = pneg %p71
      %p478 = pneg %p68
      %p479 = pneg %p92
      %p480 = pneg %p89
      %p481 = pneg %p113
      %p482 = pneg %p110
      %p483 = pneg %p134
      %p484 = pneg %p131
      %p485 = pneg %p155
      %p486 = pneg %p152
      %p487 = pneg %p176
      %p488 = pneg %p173
      %p489 = pneg %p197
      %p490 = pneg %p194
      %p491 = pneg %p218
      %p492 = pneg %p215
      %p493 = pneg %p239
      %p494 = pneg %p236
      %p495 = pneg %p260
      %p496 = pneg %p257
      %p497 = pneg %p281
      %p498 = pneg %p278
      %p499 = pneg %p302
      %p500 = pneg %p299
      %p501 = pneg %p323
      %p502 = pneg %p320
      %p503 = pneg %p344
      %p504 = pneg %p341
      %p505 = pneg %p365
      %p506 = pneg %p362
      %p507 = pneg %p391
      %p508 = pneg %p388
      %p509 = scmp.lt.s32.totalorder %s29, 1
      %s510 = scalar_select %p509, %s29, 1
      %s511 = smul.addr %s510, 2
      %s512 = smul.addr %s511, 8
      %s513 = scalar_lea.vmem %s16, %s512
      %p514 = scmp.lt.s32.totalorder %s29, 1
      %s515 = scalar_select %p514, %s29, 1
      %s516 = smul.addr %s515, 2
      %s517 = smul.addr %s516, 8
      %s518 = scalar_lea.vmem %s0, %s517
      %p519 = scmp.lt.s32.totalorder %s29, 1
      %s520 = scalar_select %p519, %s29, 1
      %s521 = smul.addr %s520, 2
      %s522 = smul.addr %s521, 8
      %s523 = scalar_lea.vmem %s16, %s522
      %v524 = vld [vmem:[%s518] sm:$0xff]
      %v525 = vld [vmem:[%s518 + $0x8] sm:$0xff]
      %v526 = vld [vmem:[%s14] sm:$0x3]
      %v527 = vld [vmem:[%s15] sm:$0x3]
      %528 = vst [vmem:[#allocation2] sm:$0xff] 0.0
      %529 = vst [vmem:[#allocation2 + $0x8] sm:$0xff] 0.0
      %530 = vst [vmem:[#allocation2 + $0x10] sm:$0xff] 0.0
      %531 = vst [vmem:[#allocation2 + $0x18] sm:$0xff] 0.0
      %vm532 = vcmp.lt.f32.partialorder %v526, 15.0
      %v533 = vsel %vm532, 1, 0
      %v534 = vcvt.s32.f32 %v533
      %vm535 = vcmp.ge.f32.partialorder %v526, 1.0
      %v536 = vsel %vm535, 1, 0
      %v537 = vcvt.s32.f32 %v536
      %vm538 = vcmp.lt.f32.partialorder %v526, 13.0
      %v539 = vsel %vm538, 1, 0
      %v540 = vcvt.s32.f32 %v539
      %vm541 = vcmp.ge.f32.partialorder %v526, 3.0
      %v542 = vsel %vm541, 1, 0
      %v543 = vcvt.s32.f32 %v542
      %vm544 = vcmp.lt.f32.partialorder %v526, 11.0
      %v545 = vsel %vm544, 1, 0
      %v546 = vcvt.s32.f32 %v545
      %vm547 = vcmp.ge.f32.partialorder %v526, 5.0
      %v548 = vsel %vm547, 1, 0
      %v549 = vcvt.s32.f32 %v548
      %550 = vst [vmem:[#allocation2 + $0x8] sm:$0xff] %v524
      %551 = vst [vmem:[#allocation2 + $0x10] sm:$0xff] %v525
      %v552 = vld [vmem:[#allocation2] sm:$0xff]
      %v553 = vld [vmem:[#allocation2 + $0x8] sm:$0xff]
      %v554 = vld [vmem:[#allocation2 + $0x10] sm:$0xff]
      %v556 = vlaneseq
      %v557 = vshrl.u32 %v556, 7
      %v558 = vsub.s32 0, %v557
      %v559 = vrot.slane %v537, %v558
      %v560 = vlaneseq
      %v561 = vshrl.u32 %v560, 7
      %v562 = vsub.s32 1, %v561
      %v563 = vrot.slane %v537, %v562
      %564 = vrot.lane.b32.xlu0 %v559, 111
      %v565 = vpop.permute.xlu0 %564
      %566 = vrot.lane.b32.xlu0 %v563, 111
      %v567 = vpop.permute.xlu0 %566
      %vm568 = vcmask 908288
      %v569 = vsel %vm568, %v565, %v567
      %v573 = vmul.f32 %v552, %v565
      %v574 = vmul.f32 %v553, %v569
      %v575 = vmul.f32 %v554, %v567
      %v577 = vlaneseq
      %v578 = vshrl.u32 %v577, 7
      %v579 = vsub.s32 0, %v578
      %v580 = vrot.slane %v534, %v579
      %v581 = vlaneseq
      %v582 = vshrl.u32 %v581, 7
      %v583 = vsub.s32 1, %v582
      %v584 = vrot.slane %v534, %v583
      %585 = vrot.lane.b32.xlu0 %v580, 113
      %v586 = vpop.permute.xlu0 %585
      %587 = vrot.lane.b32.xlu0 %v584, 113
      %v588 = vpop.permute.xlu0 %587
      %vm589 = vcmask 924672
      %v590 = vsel %vm589, %v586, %v588
      %v594 = vmul.f32 %v552, %v586
      %v595 = vmul.f32 %v553, %v590
      %v596 = vmul.f32 %v554, %v588
      %597 = vrot.lane.b32.xlu0 %v559, 127
      %v598 = vpop.permute.xlu0 %597
      %599 = vrot.lane.b32.xlu0 %v563, 127
      %v600 = vpop.permute.xlu0 %599
      %vm601 = vcmask 1039360
      %v602 = vsel %vm601, %v598, %v600
      %v606 = vmul.f32 %v552, %v598
      %v607 = vmul.f32 %v553, %v602
      %v608 = vmul.f32 %v554, %v600
      %v609 = vld [vmem:[#allocation2 + $0x8] sm:$0xff]
      %v610 = vld [vmem:[#allocation2 + $0x10] sm:$0xff]
      %v611 = vld [vmem:[#allocation2 + $0x18] sm:$0xff]
      %612 = vrot.lane.b32.xlu0 %v580, 1
      %v613 = vpop.permute.xlu0 %612
      %614 = vrot.lane.b32.xlu0 %v584, 1
      %v615 = vpop.permute.xlu0 %614
      %vm616 = vcmask 7168
      %v617 = vsel %vm616, %v613, %v615
      %v621 = vmul.f32 %v609, %v613
      %v622 = vmul.f32 %v610, %v617
      %v623 = vmul.f32 %v611, %v615
      %624 = vrot.lane.b32.xlu0 %v559, 15
      %v625 = vpop.permute.xlu0 %624
      %626 = vrot.lane.b32.xlu0 %v563, 15
      %v627 = vpop.permute.xlu0 %626
      %vm628 = vcmask 121856
      %v629 = vsel %vm628, %v625, %v627
      %v633 = vmul.f32 %v609, %v625
      %v634 = vmul.f32 %v610, %v629
      %v635 = vmul.f32 %v611, %v627
      %636 = vrot.lane.b32.xlu0 %v580, 17
      %v637 = vpop.permute.xlu0 %636
      %638 = vrot.lane.b32.xlu0 %v584, 17
      %v639 = vpop.permute.xlu0 %638
      %vm640 = vcmask 138240
      %v641 = vsel %vm640, %v637, %v639
      %v645 = vmul.f32 %v609, %v637
      %v646 = vmul.f32 %v610, %v641
      %v647 = vmul.f32 %v611, %v639
      %651 = vrot.lane.b32.xlu0 %v552, 127
      %v652 = vpop.permute.xlu0 %651
      %653 = vrot.lane.b32.xlu0 %v553, 127
      %v654 = vpop.permute.xlu0 %653
      %655 = vrot.lane.b32.xlu0 %v554, 127
      %v656 = vpop.permute.xlu0 %655
      %v657 = vsel %vm601, %v652, %v654
      %v658 = vsel %vm601, %v654, %v656
      %662 = vrot.lane.b32.xlu0 %v594, 126
      %v663 = vpop.permute.xlu0 %662
      %664 = vrot.lane.b32.xlu0 %v595, 126
      %v665 = vpop.permute.xlu0 %664
      %666 = vrot.lane.b32.xlu0 %v596, 126
      %v667 = vpop.permute.xlu0 %666
      %vm668 = vcmask 1031168
      %v669 = vsel %vm668, %v663, %v665
      %v670 = vsel %vm668, %v665, %v667
      %674 = vrot.lane.b32.xlu0 %v606, 112
      %v675 = vpop.permute.xlu0 %674
      %676 = vrot.lane.b32.xlu0 %v607, 112
      %v677 = vpop.permute.xlu0 %676
      %678 = vrot.lane.b32.xlu0 %v608, 112
      %v679 = vpop.permute.xlu0 %678
      %vm680 = vcmask 916480
      %v681 = vsel %vm680, %v675, %v677
      %v682 = vsel %vm680, %v677, %v679
      %683 = vrot.lane.b32.xlu0 %v553, 111
      %v684 = vpop.permute.xlu0 %683
      %685 = vrot.lane.b32.xlu0 %v554, 111
      %v686 = vpop.permute.xlu0 %685
      %v687 = vsel %vm568, %v684, %v686
      %691 = vrot.lane.b32.xlu0 %v621, 110
      %v692 = vpop.permute.xlu0 %691
      %693 = vrot.lane.b32.xlu0 %v622, 110
      %v694 = vpop.permute.xlu0 %693
      %695 = vrot.lane.b32.xlu0 %v623, 110
      %v696 = vpop.permute.xlu0 %695
      %vm697 = vcmask 900096
      %v698 = vsel %vm697, %v692, %v694
      %v699 = vsel %vm697, %v694, %v696
      %703 = vrot.lane.b32.xlu0 %v633, 96
      %v704 = vpop.permute.xlu0 %703
      %705 = vrot.lane.b32.xlu0 %v634, 96
      %v706 = vpop.permute.xlu0 %705
      %707 = vrot.lane.b32.xlu0 %v635, 96
      %v708 = vpop.permute.xlu0 %707
      %vm709 = vcmask 785408
      %v710 = vsel %vm709, %v704, %v706
      %v711 = vsel %vm709, %v706, %v708
      %715 = vrot.lane.b32.xlu0 %v609, 95
      %v716 = vpop.permute.xlu0 %715
      %717 = vrot.lane.b32.xlu0 %v610, 95
      %v718 = vpop.permute.xlu0 %717
      %719 = vrot.lane.b32.xlu0 %v611, 95
      %v720 = vpop.permute.xlu0 %719
      %vm721 = vcmask 777216
      %v722 = vsel %vm721, %v716, %v718
      %v723 = vsel %vm721, %v718, %v720
      %727 = vrot.lane.b32.xlu0 %v645, 94
      %v728 = vpop.permute.xlu0 %727
      %729 = vrot.lane.b32.xlu0 %v646, 94
      %v730 = vpop.permute.xlu0 %729
      %731 = vrot.lane.b32.xlu0 %v647, 94
      %v732 = vpop.permute.xlu0 %731
      %vm733 = vcmask 769024
      %v734 = vsel %vm733, %v728, %v730
      %v735 = vsel %vm733, %v730, %v732
      %v736 = vld [vmem:[%s1] sm:$0xff]
      %v737 = vld [vmem:[%s2] sm:$0xff]
      %739 = vset.pattern.permute.xlu0 0
      %740 = vperm.xlu0 %739, %v737
      %v741 = vpop.permute.xlu0 %740
      %746 = vrot.lane.b32.xlu0 %v573, 17
      %v747 = vpop.permute.xlu0 %746
      %748 = vrot.lane.b32.xlu0 %v574, 17
      %v749 = vpop.permute.xlu0 %748
      %750 = vrot.lane.b32.xlu0 %v575, 17
      %v751 = vpop.permute.xlu0 %750
      %752 = vrot.lane.b32.xlu0 %v657, 17
      %v753 = vpop.permute.xlu0 %752
      %754 = vrot.lane.b32.xlu0 %v658, 17
      %v755 = vpop.permute.xlu0 %754
      %756 = vrot.lane.b32.xlu0 %v656, 17
      %v757 = vpop.permute.xlu0 %756
      %758 = vrot.lane.b32.xlu0 %v669, 17
      %v759 = vpop.permute.xlu0 %758
      %760 = vrot.lane.b32.xlu0 %v670, 17
      %v761 = vpop.permute.xlu0 %760
      %762 = vrot.lane.b32.xlu0 %v667, 17
      %v763 = vpop.permute.xlu0 %762
      %764 = vrot.lane.b32.xlu0 %v681, 17
      %v765 = vpop.permute.xlu0 %764
      %766 = vrot.lane.b32.xlu0 %v682, 17
      %v767 = vpop.permute.xlu0 %766
      %768 = vrot.lane.b32.xlu0 %v679, 17
      %v769 = vpop.permute.xlu0 %768
      %770 = vrot.lane.b32.xlu0 %v684, 17
      %v771 = vpop.permute.xlu0 %770
      %772 = vrot.lane.b32.xlu0 %v687, 17
      %v773 = vpop.permute.xlu0 %772
      %774 = vrot.lane.b32.xlu0 %v686, 17
      %v775 = vpop.permute.xlu0 %774
      %776 = vrot.lane.b32.xlu0 %v692, 17
      %v777 = vpop.permute.xlu0 %776
      %778 = vrot.lane.b32.xlu0 %v698, 17
      %v779 = vpop.permute.xlu0 %778
      %780 = vrot.lane.b32.xlu0 %v699, 17
      %v781 = vpop.permute.xlu0 %780
      %782 = vrot.lane.b32.xlu0 %v704, 17
      %v783 = vpop.permute.xlu0 %782
      %784 = vrot.lane.b32.xlu0 %v710, 17
      %v785 = vpop.permute.xlu0 %784
      %786 = vrot.lane.b32.xlu0 %v711, 17
      %v787 = vpop.permute.xlu0 %786
      %788 = vrot.lane.b32.xlu0 %v716, 17
      %v789 = vpop.permute.xlu0 %788
      %790 = vrot.lane.b32.xlu0 %v722, 17
      %v791 = vpop.permute.xlu0 %790
      %792 = vrot.lane.b32.xlu0 %v723, 17
      %v793 = vpop.permute.xlu0 %792
      %794 = vrot.lane.b32.xlu0 %v728, 17
      %v795 = vpop.permute.xlu0 %794
      %796 = vrot.lane.b32.xlu0 %v734, 17
      %v797 = vpop.permute.xlu0 %796
      %798 = vrot.lane.b32.xlu0 %v735, 17
      %v799 = vpop.permute.xlu0 %798
      %v800 = vsel %vm640, %v747, %v749
      %v801 = vsel %vm640, %v749, %v751
      %v802 = vsel %vm640, %v753, %v755
      %v803 = vsel %vm640, %v755, %v757
      %v804 = vsel %vm640, %v759, %v761
      %v805 = vsel %vm640, %v761, %v763
      %v806 = vsel %vm640, %v765, %v767
      %v807 = vsel %vm640, %v767, %v769
      %v808 = vsel %vm640, %v771, %v773
      %v809 = vsel %vm640, %v773, %v775
      %v810 = vsel %vm640, %v777, %v779
      %v811 = vsel %vm640, %v779, %v781
      %v812 = vsel %vm640, %v783, %v785
      %v813 = vsel %vm640, %v785, %v787
      %v814 = vsel %vm640, %v789, %v791
      %v815 = vsel %vm640, %v791, %v793
      %v816 = vsel %vm640, %v795, %v797
      %v817 = vsel %vm640, %v797, %v799
      %vm836 = vcmask 588800
      %v838 = vsel %vm836, %v736, 0
      %840 = vmatprep.subr.mxu0 %v801
      %841 = vmatpush1.msra.mxu0 %v800
      %842 = vmatprep.subr.mxu0 %v803
      %843 = vmatpush1.msra.mxu0 %v802
      %844 = vmatprep.subr.mxu0 %v805
      %845 = vmatpush1.msra.mxu0 %v804
      %846 = vmatprep.subr.mxu0 %v807
      %847 = vmatpush1.msra.mxu0 %v806
      %848 = vmatprep.subr.mxu0 %v809
      %849 = vmatpush1.msra.mxu0 %v808
      %850 = vmatprep.subr.mxu0 %v811
      %851 = vmatpush1.msra.mxu0 %v810
      %852 = vmatprep.subr.mxu0 %v813
      %853 = vmatpush1.msra.mxu0 %v812
      %854 = vmatprep.subr.mxu0 %v815
      %855 = vmatpush1.msra.mxu0 %v814
      %856 = vmatprep.subr.mxu0 %v817
      %857 = vmatpush1.msra.mxu0 %v816
      %858 = vmatprep.subr.mxu0 0.0
      %859 = vmatpush1.msra.mxu0 0.0
      %860 = vmatprep.subr.mxu0 0.0
      %861 = vmatpush1.msra.mxu0 0.0
      %862 = vmatprep.subr.mxu0 0.0
      %863 = vmatpush1.msra.mxu0 0.0
      %864 = vmatprep.subr.mxu0 0.0
      %865 = vmatpush1.msra.mxu0 0.0
      %866 = vmatprep.subr.mxu0 0.0
      %867 = vmatpush1.msra.mxu0 0.0
      %868 = vmatprep.subr.mxu0 0.0
      %869 = vmatpush1.msra.mxu0 0.0
      %870 = vmatprep.subr.mxu0 0.0
      %871 = vmatpush1.msra.mxu0 0.0
      %872 = vmatprep.subr.mxu0 0.0
      %873 = vmatpush1.msra.mxu0 0.0
      %874 = vmatprep.subr.mxu0 0.0
      %875 = vmatpush1.msra.mxu0 0.0
      %876 = vmatprep.subr.mxu0 0.0
      %877 = vmatpush1.msra.mxu0 0.0
      %878 = vmatprep.subr.mxu0 0.0
      %879 = vmatpush1.msra.mxu0 0.0
      %880 = vmatprep.subr.mxu0 0.0
      %881 = vmatpush1.msra.mxu0 0.0
      %882 = vmatprep.subr.mxu0 0.0
      %883 = vmatpush1.msra.mxu0 0.0
      %884 = vmatprep.subr.mxu0 0.0
      %885 = vmatpush1.msra.mxu0 0.0
      %886 = vmatprep.subr.mxu0 0.0
      %887 = vmatpush1.msra.mxu0 0.0
      %888 = vmatprep.subr.mxu0 0.0
      %889 = vmatpush1.msra.mxu0 0.0
      %890 = vmatprep.subr.mxu0 0.0
      %891 = vmatpush1.msra.mxu0 0.0
      %892 = vmatprep.subr.mxu0 0.0
      %893 = vmatpush1.msra.mxu0 0.0
      %894 = vmatprep.subr.mxu0 0.0
      %895 = vmatpush1.msra.mxu0 0.0
      %896 = vmatprep.subr.mxu0 0.0
      %897 = vmatpush1.msra.mxu0 0.0
      %898 = vmatprep.subr.mxu0 0.0
      %899 = vmatpush1.msra.mxu0 0.0
      %900 = vmatprep.subr.mxu0 0.0
      %901 = vmatpush1.msra.mxu0 0.0
      %902 = vmatprep.subr.mxu0 0.0
      %903 = vmatpush1.msra.mxu0 0.0
      %904 = vmatprep.mubr.f32.mxu0 0.0
      %905 = vmatmul.mubr.f32.gmra.mrb[0].mxu0 %v838
      %v906 = vpop.f32.mrb[0].mxu0
      %v907 = vadd.f32 %v741, %v906
      %v908 = vpop.f32.mrb[0].mxu0
      %v909 = vadd.f32 %v741, %v908
      %910 = vdwg.mxu0
      %911 = vst [vmem:[#allocation2 + $0x8] sm:$0xff] %v907
      %912 = vst [vmem:[#allocation2 + $0x10] sm:$0xff] %v909
      %v913 = vld [vmem:[#allocation2] sm:$0xff]
      %v914 = vld [vmem:[#allocation2 + $0x8] sm:$0xff]
      %v915 = vld [vmem:[#allocation2 + $0x10] sm:$0xff]
      %v917 = vlaneseq
      %v918 = vshrl.u32 %v917, 7
      %v919 = vsub.s32 0, %v918
      %v920 = vrot.slane %v543, %v919
      %v921 = vlaneseq
      %v922 = vshrl.u32 %v921, 7
      %v923 = vsub.s32 1, %v922
      %v924 = vrot.slane %v543, %v923
      %925 = vrot.lane.b32.xlu0 %v920, 77
      %v926 = vpop.permute.xlu0 %925
      %927 = vrot.lane.b32.xlu0 %v924, 77
      %v928 = vpop.permute.xlu0 %927
      %vm929 = vcmask 629760
      %v930 = vsel %vm929, %v926, %v928
      %v934 = vmul.f32 %v913, %v926
      %v935 = vmul.f32 %v914, %v930
      %v936 = vmul.f32 %v915, %v928
      %v938 = vlaneseq
      %v939 = vshrl.u32 %v938, 7
      %v940 = vsub.s32 0, %v939
      %v941 = vrot.slane %v540, %v940
      %v942 = vlaneseq
      %v943 = vshrl.u32 %v942, 7
      %v944 = vsub.s32 1, %v943
      %v945 = vrot.slane %v540, %v944
      %946 = vrot.lane.b32.xlu0 %v941, 83
      %v947 = vpop.permute.xlu0 %946
      %948 = vrot.lane.b32.xlu0 %v945, 83
      %v949 = vpop.permute.xlu0 %948
      %vm950 = vcmask 678912
      %v951 = vsel %vm950, %v947, %v949
      %v955 = vmul.f32 %v913, %v947
      %v956 = vmul.f32 %v914, %v951
      %v957 = vmul.f32 %v915, %v949
      %958 = vrot.lane.b32.xlu0 %v920, 125
      %v959 = vpop.permute.xlu0 %958
      %960 = vrot.lane.b32.xlu0 %v924, 125
      %v961 = vpop.permute.xlu0 %960
      %vm962 = vcmask 1022976
      %v963 = vsel %vm962, %v959, %v961
      %v967 = vmul.f32 %v913, %v959
      %v968 = vmul.f32 %v914, %v963
      %v969 = vmul.f32 %v915, %v961
      %v970 = vld [vmem:[#allocation2 + $0x8] sm:$0xff]
      %v971 = vld [vmem:[#allocation2 + $0x10] sm:$0xff]
      %v972 = vld [vmem:[#allocation2 + $0x18] sm:$0xff]
      %973 = vrot.lane.b32.xlu0 %v941, 3
      %v974 = vpop.permute.xlu0 %973
      %975 = vrot.lane.b32.xlu0 %v945, 3
      %v976 = vpop.permute.xlu0 %975
      %vm977 = vcmask 23552
      %v978 = vsel %vm977, %v974, %v976
      %v982 = vmul.f32 %v970, %v974
      %v983 = vmul.f32 %v971, %v978
      %v984 = vmul.f32 %v972, %v976
      %985 = vrot.lane.b32.xlu0 %v920, 45
      %v986 = vpop.permute.xlu0 %985
      %987 = vrot.lane.b32.xlu0 %v924, 45
      %v988 = vpop.permute.xlu0 %987
      %vm989 = vcmask 367616
      %v990 = vsel %vm989, %v986, %v988
      %v994 = vmul.f32 %v970, %v986
      %v995 = vmul.f32 %v971, %v990
      %v996 = vmul.f32 %v972, %v988
      %997 = vrot.lane.b32.xlu0 %v941, 51
      %v998 = vpop.permute.xlu0 %997
      %999 = vrot.lane.b32.xlu0 %v945, 51
      %v1000 = vpop.permute.xlu0 %999
      %vm1001 = vcmask 416768
      %v1002 = vsel %vm1001, %v998, %v1000
      %v1006 = vmul.f32 %v970, %v998
      %v1007 = vmul.f32 %v971, %v1002
      %v1008 = vmul.f32 %v972, %v1000
      %1012 = vrot.lane.b32.xlu0 %v913, 125
      %v1013 = vpop.permute.xlu0 %1012
      %1014 = vrot.lane.b32.xlu0 %v914, 125
      %v1015 = vpop.permute.xlu0 %1014
      %1016 = vrot.lane.b32.xlu0 %v915, 125
      %v1017 = vpop.permute.xlu0 %1016
      %v1018 = vsel %vm962, %v1013, %v1015
      %v1019 = vsel %vm962, %v1015, %v1017
      %1023 = vrot.lane.b32.xlu0 %v955, 122
      %v1024 = vpop.permute.xlu0 %1023
      %1025 = vrot.lane.b32.xlu0 %v956, 122
      %v1026 = vpop.permute.xlu0 %1025
      %1027 = vrot.lane.b32.xlu0 %v957, 122
      %v1028 = vpop.permute.xlu0 %1027
      %vm1029 = vcmask 998400
      %v1030 = vsel %vm1029, %v1024, %v1026
      %v1031 = vsel %vm1029, %v1026, %v1028
      %1035 = vrot.lane.b32.xlu0 %v967, 80
      %v1036 = vpop.permute.xlu0 %1035
      %1037 = vrot.lane.b32.xlu0 %v968, 80
      %v1038 = vpop.permute.xlu0 %1037
      %1039 = vrot.lane.b32.xlu0 %v969, 80
      %v1040 = vpop.permute.xlu0 %1039
      %vm1041 = vcmask 654336
      %v1042 = vsel %vm1041, %v1036, %v1038
      %v1043 = vsel %vm1041, %v1038, %v1040
      %1044 = vrot.lane.b32.xlu0 %v914, 77
      %v1045 = vpop.permute.xlu0 %1044
      %1046 = vrot.lane.b32.xlu0 %v915, 77
      %v1047 = vpop.permute.xlu0 %1046
      %v1048 = vsel %vm929, %v1045, %v1047
      %1052 = vrot.lane.b32.xlu0 %v982, 74
      %v1053 = vpop.permute.xlu0 %1052
      %1054 = vrot.lane.b32.xlu0 %v983, 74
      %v1055 = vpop.permute.xlu0 %1054
      %1056 = vrot.lane.b32.xlu0 %v984, 74
      %v1057 = vpop.permute.xlu0 %1056
      %vm1058 = vcmask 605184
      %v1059 = vsel %vm1058, %v1053, %v1055
      %v1060 = vsel %vm1058, %v1055, %v1057
      %1064 = vrot.lane.b32.xlu0 %v994, 32
      %v1065 = vpop.permute.xlu0 %1064
      %1066 = vrot.lane.b32.xlu0 %v995, 32
      %v1067 = vpop.permute.xlu0 %1066
      %1068 = vrot.lane.b32.xlu0 %v996, 32
      %v1069 = vpop.permute.xlu0 %1068
      %vm1070 = vcmask 261120
      %v1071 = vsel %vm1070, %v1065, %v1067
      %v1072 = vsel %vm1070, %v1067, %v1069
      %1076 = vrot.lane.b32.xlu0 %v970, 29
      %v1077 = vpop.permute.xlu0 %1076
      %1078 = vrot.lane.b32.xlu0 %v971, 29
      %v1079 = vpop.permute.xlu0 %1078
      %1080 = vrot.lane.b32.xlu0 %v972, 29
      %v1081 = vpop.permute.xlu0 %1080
      %vm1082 = vcmask 236544
      %v1083 = vsel %vm1082, %v1077, %v1079
      %v1084 = vsel %vm1082, %v1079, %v1081
      %1088 = vrot.lane.b32.xlu0 %v1006, 26
      %v1089 = vpop.permute.xlu0 %1088
      %1090 = vrot.lane.b32.xlu0 %v1007, 26
      %v1091 = vpop.permute.xlu0 %1090
      %1092 = vrot.lane.b32.xlu0 %v1008, 26
      %v1093 = vpop.permute.xlu0 %1092
      %vm1094 = vcmask 211968
      %v1095 = vsel %vm1094, %v1089, %v1091
      %v1096 = vsel %vm1094, %v1091, %v1093
      %v1097 = vld [vmem:[%s3] sm:$0xff]
      %v1098 = vld [vmem:[%s4] sm:$0xff]
      %1100 = vset.pattern.permute.xlu0 0
      %1101 = vperm.xlu0 %1100, %v1098
      %v1102 = vpop.permute.xlu0 %1101
      %1107 = vrot.lane.b32.xlu0 %v934, 51
      %v1108 = vpop.permute.xlu0 %1107
      %1109 = vrot.lane.b32.xlu0 %v935, 51
      %v1110 = vpop.permute.xlu0 %1109
      %1111 = vrot.lane.b32.xlu0 %v936, 51
      %v1112 = vpop.permute.xlu0 %1111
      %1113 = vrot.lane.b32.xlu0 %v1018, 51
      %v1114 = vpop.permute.xlu0 %1113
      %1115 = vrot.lane.b32.xlu0 %v1019, 51
      %v1116 = vpop.permute.xlu0 %1115
      %1117 = vrot.lane.b32.xlu0 %v1017, 51
      %v1118 = vpop.permute.xlu0 %1117
      %1119 = vrot.lane.b32.xlu0 %v1030, 51
      %v1120 = vpop.permute.xlu0 %1119
      %1121 = vrot.lane.b32.xlu0 %v1031, 51
      %v1122 = vpop.permute.xlu0 %1121
      %1123 = vrot.lane.b32.xlu0 %v1028, 51
      %v1124 = vpop.permute.xlu0 %1123
      %1125 = vrot.lane.b32.xlu0 %v1042, 51
      %v1126 = vpop.permute.xlu0 %1125
      %1127 = vrot.lane.b32.xlu0 %v1043, 51
      %v1128 = vpop.permute.xlu0 %1127
      %1129 = vrot.lane.b32.xlu0 %v1040, 51
      %v1130 = vpop.permute.xlu0 %1129
      %1131 = vrot.lane.b32.xlu0 %v1045, 51
      %v1132 = vpop.permute.xlu0 %1131
      %1133 = vrot.lane.b32.xlu0 %v1048, 51
      %v1134 = vpop.permute.xlu0 %1133
      %1135 = vrot.lane.b32.xlu0 %v1047, 51
      %v1136 = vpop.permute.xlu0 %1135
      %1137 = vrot.lane.b32.xlu0 %v1053, 51
      %v1138 = vpop.permute.xlu0 %1137
      %1139 = vrot.lane.b32.xlu0 %v1059, 51
      %v1140 = vpop.permute.xlu0 %1139
      %1141 = vrot.lane.b32.xlu0 %v1060, 51
      %v1142 = vpop.permute.xlu0 %1141
      %1143 = vrot.lane.b32.xlu0 %v1065, 51
      %v1144 = vpop.permute.xlu0 %1143
      %1145 = vrot.lane.b32.xlu0 %v1071, 51
      %v1146 = vpop.permute.xlu0 %1145
      %1147 = vrot.lane.b32.xlu0 %v1072, 51
      %v1148 = vpop.permute.xlu0 %1147
      %1149 = vrot.lane.b32.xlu0 %v1077, 51
      %v1150 = vpop.permute.xlu0 %1149
      %1151 = vrot.lane.b32.xlu0 %v1083, 51
      %v1152 = vpop.permute.xlu0 %1151
      %1153 = vrot.lane.b32.xlu0 %v1084, 51
      %v1154 = vpop.permute.xlu0 %1153
      %1155 = vrot.lane.b32.xlu0 %v1089, 51
      %v1156 = vpop.permute.xlu0 %1155
      %1157 = vrot.lane.b32.xlu0 %v1095, 51
      %v1158 = vpop.permute.xlu0 %1157
      %1159 = vrot.lane.b32.xlu0 %v1096, 51
      %v1160 = vpop.permute.xlu0 %1159
      %v1161 = vsel %vm1001, %v1108, %v1110
      %v1162 = vsel %vm1001, %v1110, %v1112
      %v1163 = vsel %vm1001, %v1114, %v1116
      %v1164 = vsel %vm1001, %v1116, %v1118
      %v1165 = vsel %vm1001, %v1120, %v1122
      %v1166 = vsel %vm1001, %v1122, %v1124
      %v1167 = vsel %vm1001, %v1126, %v1128
      %v1168 = vsel %vm1001, %v1128, %v1130
      %v1169 = vsel %vm1001, %v1132, %v1134
      %v1170 = vsel %vm1001, %v1134, %v1136
      %v1171 = vsel %vm1001, %v1138, %v1140
      %v1172 = vsel %vm1001, %v1140, %v1142
      %v1173 = vsel %vm1001, %v1144, %v1146
      %v1174 = vsel %vm1001, %v1146, %v1148
      %v1175 = vsel %vm1001, %v1150, %v1152
      %v1176 = vsel %vm1001, %v1152, %v1154
      %v1177 = vsel %vm1001, %v1156, %v1158
      %v1178 = vsel %vm1001, %v1158, %v1160
      %v1198 = vsel %vm836, %v1097, 0
      %1200 = vmatprep.subr.mxu0 %v1162
      %1201 = vmatpush1.msra.mxu0 %v1161
      %1202 = vmatprep.subr.mxu0 %v1164
      %1203 = vmatpush1.msra.mxu0 %v1163
      %1204 = vmatprep.subr.mxu0 %v1166
      %1205 = vmatpush1.msra.mxu0 %v1165
      %1206 = vmatprep.subr.mxu0 %v1168
      %1207 = vmatpush1.msra.mxu0 %v1167
      %1208 = vmatprep.subr.mxu0 %v1170
      %1209 = vmatpush1.msra.mxu0 %v1169
      %1210 = vmatprep.subr.mxu0 %v1172
      %1211 = vmatpush1.msra.mxu0 %v1171
      %1212 = vmatprep.subr.mxu0 %v1174
      %1213 = vmatpush1.msra.mxu0 %v1173
      %1214 = vmatprep.subr.mxu0 %v1176
      %1215 = vmatpush1.msra.mxu0 %v1175
      %1216 = vmatprep.subr.mxu0 %v1178
      %1217 = vmatpush1.msra.mxu0 %v1177
      %1218 = vmatprep.subr.mxu0 0.0
      %1219 = vmatpush1.msra.mxu0 0.0
      %1220 = vmatprep.subr.mxu0 0.0
      %1221 = vmatpush1.msra.mxu0 0.0
      %1222 = vmatprep.subr.mxu0 0.0
      %1223 = vmatpush1.msra.mxu0 0.0
      %1224 = vmatprep.subr.mxu0 0.0
      %1225 = vmatpush1.msra.mxu0 0.0
      %1226 = vmatprep.subr.mxu0 0.0
      %1227 = vmatpush1.msra.mxu0 0.0
      %1228 = vmatprep.subr.mxu0 0.0
      %1229 = vmatpush1.msra.mxu0 0.0
      %1230 = vmatprep.subr.mxu0 0.0
      %1231 = vmatpush1.msra.mxu0 0.0
      %1232 = vmatprep.subr.mxu0 0.0
      %1233 = vmatpush1.msra.mxu0 0.0
      %1234 = vmatprep.subr.mxu0 0.0
      %1235 = vmatpush1.msra.mxu0 0.0
      %1236 = vmatprep.subr.mxu0 0.0
      %1237 = vmatpush1.msra.mxu0 0.0
      %1238 = vmatprep.subr.mxu0 0.0
      %1239 = vmatpush1.msra.mxu0 0.0
      %1240 = vmatprep.subr.mxu0 0.0
      %1241 = vmatpush1.msra.mxu0 0.0
      %1242 = vmatprep.subr.mxu0 0.0
      %1243 = vmatpush1.msra.mxu0 0.0
      %1244 = vmatprep.subr.mxu0 0.0
      %1245 = vmatpush1.msra.mxu0 0.0
      %1246 = vmatprep.subr.mxu0 0.0
      %1247 = vmatpush1.msra.mxu0 0.0
      %1248 = vmatprep.subr.mxu0 0.0
      %1249 = vmatpush1.msra.mxu0 0.0
      %1250 = vmatprep.subr.mxu0 0.0
      %1251 = vmatpush1.msra.mxu0 0.0
      %1252 = vmatprep.subr.mxu0 0.0
      %1253 = vmatpush1.msra.mxu0 0.0
      %1254 = vmatprep.subr.mxu0 0.0
      %1255 = vmatpush1.msra.mxu0 0.0
      %1256 = vmatprep.subr.mxu0 0.0
      %1257 = vmatpush1.msra.mxu0 0.0
      %1258 = vmatprep.subr.mxu0 0.0
      %1259 = vmatpush1.msra.mxu0 0.0
      %1260 = vmatprep.subr.mxu0 0.0
      %1261 = vmatpush1.msra.mxu0 0.0
      %1262 = vmatprep.subr.mxu0 0.0
      %1263 = vmatpush1.msra.mxu0 0.0
      %1264 = vmatprep.mubr.f32.mxu0 0.0
      %1265 = vmatmul.mubr.f32.gmra.mrb[0].mxu0 %v1198
      %v1266 = vpop.f32.mrb[0].mxu0
      %v1267 = vadd.f32 %v1102, %v1266
      %v1268 = vpop.f32.mrb[0].mxu0
      %v1269 = vadd.f32 %v1102, %v1268
      %1270 = vdwg.mxu0
      %1271 = vst [vmem:[#allocation2 + $0x8] sm:$0xff] %v1267
      %1272 = vst [vmem:[#allocation2 + $0x10] sm:$0xff] %v1269
      %v1273 = vld [vmem:[#allocation2] sm:$0xff]
      %v1274 = vld [vmem:[#allocation2 + $0x8] sm:$0xff]
      %v1275 = vld [vmem:[#allocation2 + $0x10] sm:$0xff]
      %v1277 = vlaneseq
      %v1278 = vshrl.u32 %v1277, 7
      %v1279 = vsub.s32 0, %v1278
      %v1280 = vrot.slane %v549, %v1279
      %v1281 = vlaneseq
      %v1282 = vshrl.u32 %v1281, 7
      %v1283 = vsub.s32 1, %v1282
      %v1284 = vrot.slane %v549, %v1283
      %1285 = vrot.lane.b32.xlu0 %v1280, 43
      %v1286 = vpop.permute.xlu0 %1285
      %1287 = vrot.lane.b32.xlu0 %v1284, 43
      %v1288 = vpop.permute.xlu0 %1287
      %vm1289 = vcmask 351232
      %v1290 = vsel %vm1289, %v1286, %v1288
      %v1294 = vmul.f32 %v1273, %v1286
      %v1295 = vmul.f32 %v1274, %v1290
      %v1296 = vmul.f32 %v1275, %v1288
      %v1298 = vlaneseq
      %v1299 = vshrl.u32 %v1298, 7
      %v1300 = vsub.s32 0, %v1299
      %v1301 = vrot.slane %v546, %v1300
      %v1302 = vlaneseq
      %v1303 = vshrl.u32 %v1302, 7
      %v1304 = vsub.s32 1, %v1303
      %v1305 = vrot.slane %v546, %v1304
      %1306 = vrot.lane.b32.xlu0 %v1301, 53
      %v1307 = vpop.permute.xlu0 %1306
      %1308 = vrot.lane.b32.xlu0 %v1305, 53
      %v1309 = vpop.permute.xlu0 %1308
      %vm1310 = vcmask 433152
      %v1311 = vsel %vm1310, %v1307, %v1309
      %v1315 = vmul.f32 %v1273, %v1307
      %v1316 = vmul.f32 %v1274, %v1311
      %v1317 = vmul.f32 %v1275, %v1309
      %1318 = vrot.lane.b32.xlu0 %v1280, 123
      %v1319 = vpop.permute.xlu0 %1318
      %1320 = vrot.lane.b32.xlu0 %v1284, 123
      %v1321 = vpop.permute.xlu0 %1320
      %vm1322 = vcmask 1006592
      %v1323 = vsel %vm1322, %v1319, %v1321
      %v1327 = vmul.f32 %v1273, %v1319
      %v1328 = vmul.f32 %v1274, %v1323
      %v1329 = vmul.f32 %v1275, %v1321
      %v1330 = vld [vmem:[#allocation2 + $0x8] sm:$0xff]
      %v1331 = vld [vmem:[#allocation2 + $0x10] sm:$0xff]
      %v1332 = vld [vmem:[#allocation2 + $0x18] sm:$0xff]
      %1333 = vrot.lane.b32.xlu0 %v1301, 5
      %v1334 = vpop.permute.xlu0 %1333
      %1335 = vrot.lane.b32.xlu0 %v1305, 5
      %v1336 = vpop.permute.xlu0 %1335
      %vm1337 = vcmask 39936
      %v1338 = vsel %vm1337, %v1334, %v1336
      %v1342 = vmul.f32 %v1330, %v1334
      %v1343 = vmul.f32 %v1331, %v1338
      %v1344 = vmul.f32 %v1332, %v1336
      %1345 = vrot.lane.b32.xlu0 %v1280, 75
      %v1346 = vpop.permute.xlu0 %1345
      %1347 = vrot.lane.b32.xlu0 %v1284, 75
      %v1348 = vpop.permute.xlu0 %1347
      %vm1349 = vcmask 613376
      %v1350 = vsel %vm1349, %v1346, %v1348
      %v1354 = vmul.f32 %v1330, %v1346
      %v1355 = vmul.f32 %v1331, %v1350
      %v1356 = vmul.f32 %v1332, %v1348
      %1357 = vrot.lane.b32.xlu0 %v1301, 85
      %v1358 = vpop.permute.xlu0 %1357
      %1359 = vrot.lane.b32.xlu0 %v1305, 85
      %v1360 = vpop.permute.xlu0 %1359
      %vm1361 = vcmask 695296
      %v1362 = vsel %vm1361, %v1358, %v1360
      %v1366 = vmul.f32 %v1330, %v1358
      %v1367 = vmul.f32 %v1331, %v1362
      %v1368 = vmul.f32 %v1332, %v1360
      %1372 = vrot.lane.b32.xlu0 %v1273, 123
      %v1373 = vpop.permute.xlu0 %1372
      %1374 = vrot.lane.b32.xlu0 %v1274, 123
      %v1375 = vpop.permute.xlu0 %1374
      %1376 = vrot.lane.b32.xlu0 %v1275, 123
      %v1377 = vpop.permute.xlu0 %1376
      %v1378 = vsel %vm1322, %v1373, %v1375
      %v1379 = vsel %vm1322, %v1375, %v1377
      %1383 = vrot.lane.b32.xlu0 %v1315, 118
      %v1384 = vpop.permute.xlu0 %1383
      %1385 = vrot.lane.b32.xlu0 %v1316, 118
      %v1386 = vpop.permute.xlu0 %1385
      %1387 = vrot.lane.b32.xlu0 %v1317, 118
      %v1388 = vpop.permute.xlu0 %1387
      %vm1389 = vcmask 965632
      %v1390 = vsel %vm1389, %v1384, %v1386
      %v1391 = vsel %vm1389, %v1386, %v1388
      %1395 = vrot.lane.b32.xlu0 %v1327, 48
      %v1396 = vpop.permute.xlu0 %1395
      %1397 = vrot.lane.b32.xlu0 %v1328, 48
      %v1398 = vpop.permute.xlu0 %1397
      %1399 = vrot.lane.b32.xlu0 %v1329, 48
      %v1400 = vpop.permute.xlu0 %1399
      %vm1401 = vcmask 392192
      %v1402 = vsel %vm1401, %v1396, %v1398
      %v1403 = vsel %vm1401, %v1398, %v1400
      %1404 = vrot.lane.b32.xlu0 %v1274, 43
      %v1405 = vpop.permute.xlu0 %1404
      %1406 = vrot.lane.b32.xlu0 %v1275, 43
      %v1407 = vpop.permute.xlu0 %1406
      %v1408 = vsel %vm1289, %v1405, %v1407
      %1412 = vrot.lane.b32.xlu0 %v1342, 38
      %v1413 = vpop.permute.xlu0 %1412
      %1414 = vrot.lane.b32.xlu0 %v1343, 38
      %v1415 = vpop.permute.xlu0 %1414
      %1416 = vrot.lane.b32.xlu0 %v1344, 38
      %v1417 = vpop.permute.xlu0 %1416
      %vm1418 = vcmask 310272
      %v1419 = vsel %vm1418, %v1413, %v1415
      %v1420 = vsel %vm1418, %v1415, %v1417
      %1424 = vrot.lane.b32.xlu0 %v1354, 96
      %v1425 = vpop.permute.xlu0 %1424
      %1426 = vrot.lane.b32.xlu0 %v1355, 96
      %v1427 = vpop.permute.xlu0 %1426
      %1428 = vrot.lane.b32.xlu0 %v1356, 96
      %v1429 = vpop.permute.xlu0 %1428
      %v1430 = vsel %vm709, %v1425, %v1427
      %v1431 = vsel %vm709, %v1427, %v1429
      %1435 = vrot.lane.b32.xlu0 %v1330, 91
      %v1436 = vpop.permute.xlu0 %1435
      %1437 = vrot.lane.b32.xlu0 %v1331, 91
      %v1438 = vpop.permute.xlu0 %1437
      %1439 = vrot.lane.b32.xlu0 %v1332, 91
      %v1440 = vpop.permute.xlu0 %1439
      %vm1441 = vcmask 744448
      %v1442 = vsel %vm1441, %v1436, %v1438
      %v1443 = vsel %vm1441, %v1438, %v1440
      %1447 = vrot.lane.b32.xlu0 %v1366, 86
      %v1448 = vpop.permute.xlu0 %1447
      %1449 = vrot.lane.b32.xlu0 %v1367, 86
      %v1450 = vpop.permute.xlu0 %1449
      %1451 = vrot.lane.b32.xlu0 %v1368, 86
      %v1452 = vpop.permute.xlu0 %1451
      %vm1453 = vcmask 703488
      %v1454 = vsel %vm1453, %v1448, %v1450
      %v1455 = vsel %vm1453, %v1450, %v1452
      %v1456 = vld [vmem:[%s5] sm:$0xff]
      %v1457 = vld [vmem:[%s6] sm:$0xff]
      %1459 = vset.pattern.permute.xlu0 0
      %1460 = vperm.xlu0 %1459, %v1457
      %v1461 = vpop.permute.xlu0 %1460
      %1466 = vrot.lane.b32.xlu0 %v1294, 85
      %v1467 = vpop.permute.xlu0 %1466
      %1468 = vrot.lane.b32.xlu0 %v1295, 85
      %v1469 = vpop.permute.xlu0 %1468
      %1470 = vrot.lane.b32.xlu0 %v1296, 85
      %v1471 = vpop.permute.xlu0 %1470
      %1472 = vrot.lane.b32.xlu0 %v1378, 85
      %v1473 = vpop.permute.xlu0 %1472
      %1474 = vrot.lane.b32.xlu0 %v1379, 85
      %v1475 = vpop.permute.xlu0 %1474
      %1476 = vrot.lane.b32.xlu0 %v1377, 85
      %v1477 = vpop.permute.xlu0 %1476
      %1478 = vrot.lane.b32.xlu0 %v1390, 85
      %v1479 = vpop.permute.xlu0 %1478
      %1480 = vrot.lane.b32.xlu0 %v1391, 85
      %v1481 = vpop.permute.xlu0 %1480
      %1482 = vrot.lane.b32.xlu0 %v1388, 85
      %v1483 = vpop.permute.xlu0 %1482
      %1484 = vrot.lane.b32.xlu0 %v1402, 85
      %v1485 = vpop.permute.xlu0 %1484
      %1486 = vrot.lane.b32.xlu0 %v1403, 85
      %v1487 = vpop.permute.xlu0 %1486
      %1488 = vrot.lane.b32.xlu0 %v1400, 85
      %v1489 = vpop.permute.xlu0 %1488
      %1490 = vrot.lane.b32.xlu0 %v1405, 85
      %v1491 = vpop.permute.xlu0 %1490
      %1492 = vrot.lane.b32.xlu0 %v1408, 85
      %v1493 = vpop.permute.xlu0 %1492
      %1494 = vrot.lane.b32.xlu0 %v1407, 85
      %v1495 = vpop.permute.xlu0 %1494
      %1496 = vrot.lane.b32.xlu0 %v1413, 85
      %v1497 = vpop.permute.xlu0 %1496
      %1498 = vrot.lane.b32.xlu0 %v1419, 85
      %v1499 = vpop.permute.xlu0 %1498
      %1500 = vrot.lane.b32.xlu0 %v1420, 85
      %v1501 = vpop.permute.xlu0 %1500
      %1502 = vrot.lane.b32.xlu0 %v1430, 85
      %v1503 = vpop.permute.xlu0 %1502
      %1504 = vrot.lane.b32.xlu0 %v1431, 85
      %v1505 = vpop.permute.xlu0 %1504
      %1506 = vrot.lane.b32.xlu0 %v1429, 85
      %v1507 = vpop.permute.xlu0 %1506
      %1508 = vrot.lane.b32.xlu0 %v1442, 85
      %v1509 = vpop.permute.xlu0 %1508
      %1510 = vrot.lane.b32.xlu0 %v1443, 85
      %v1511 = vpop.permute.xlu0 %1510
      %1512 = vrot.lane.b32.xlu0 %v1440, 85
      %v1513 = vpop.permute.xlu0 %1512
      %1514 = vrot.lane.b32.xlu0 %v1454, 85
      %v1515 = vpop.permute.xlu0 %1514
      %1516 = vrot.lane.b32.xlu0 %v1455, 85
      %v1517 = vpop.permute.xlu0 %1516
      %1518 = vrot.lane.b32.xlu0 %v1452, 85
      %v1519 = vpop.permute.xlu0 %1518
      %v1520 = vsel %vm1361, %v1467, %v1469
      %v1521 = vsel %vm1361, %v1469, %v1471
      %v1522 = vsel %vm1361, %v1473, %v1475
      %v1523 = vsel %vm1361, %v1475, %v1477
      %v1524 = vsel %vm1361, %v1479, %v1481
      %v1525 = vsel %vm1361, %v1481, %v1483
      %v1526 = vsel %vm1361, %v1485, %v1487
      %v1527 = vsel %vm1361, %v1487, %v1489
      %v1528 = vsel %vm1361, %v1491, %v1493
      %v1529 = vsel %vm1361, %v1493, %v1495
      %v1530 = vsel %vm1361, %v1497, %v1499
      %v1531 = vsel %vm1361, %v1499, %v1501
      %v1532 = vsel %vm1361, %v1503, %v1505
      %v1533 = vsel %vm1361, %v1505, %v1507
      %v1534 = vsel %vm1361, %v1509, %v1511
      %v1535 = vsel %vm1361, %v1511, %v1513
      %v1536 = vsel %vm1361, %v1515, %v1517
      %v1537 = vsel %vm1361, %v1517, %v1519
      %v1557 = vsel %vm836, %v1456, 0
      %1559 = vmatprep.subr.mxu0 %v1521
      %1560 = vmatpush1.msra.mxu0 %v1520
      %1561 = vmatprep.subr.mxu0 %v1523
      %1562 = vmatpush1.msra.mxu0 %v1522
      %1563 = vmatprep.subr.mxu0 %v1525
      %1564 = vmatpush1.msra.mxu0 %v1524
      %1565 = vmatprep.subr.mxu0 %v1527
      %1566 = vmatpush1.msra.mxu0 %v1526
      %1567 = vmatprep.subr.mxu0 %v1529
      %1568 = vmatpush1.msra.mxu0 %v1528
      %1569 = vmatprep.subr.mxu0 %v1531
      %1570 = vmatpush1.msra.mxu0 %v1530
      %1571 = vmatprep.subr.mxu0 %v1533
      %1572 = vmatpush1.msra.mxu0 %v1532
      %1573 = vmatprep.subr.mxu0 %v1535
      %1574 = vmatpush1.msra.mxu0 %v1534
      %1575 = vmatprep.subr.mxu0 %v1537
      %1576 = vmatpush1.msra.mxu0 %v1536
      %1577 = vmatprep.subr.mxu0 0.0
      %1578 = vmatpush1.msra.mxu0 0.0
      %1579 = vmatprep.subr.mxu0 0.0
      %1580 = vmatpush1.msra.mxu0 0.0
      %1581 = vmatprep.subr.mxu0 0.0
      %1582 = vmatpush1.msra.mxu0 0.0
      %1583 = vmatprep.subr.mxu0 0.0
      %1584 = vmatpush1.msra.mxu0 0.0
      %1585 = vmatprep.subr.mxu0 0.0
      %1586 = vmatpush1.msra.mxu0 0.0
      %1587 = vmatprep.subr.mxu0 0.0
      %1588 = vmatpush1.msra.mxu0 0.0
      %1589 = vmatprep.subr.mxu0 0.0
      %1590 = vmatpush1.msra.mxu0 0.0
      %1591 = vmatprep.subr.mxu0 0.0
      %1592 = vmatpush1.msra.mxu0 0.0
      %1593 = vmatprep.subr.mxu0 0.0
      %1594 = vmatpush1.msra.mxu0 0.0
      %1595 = vmatprep.subr.mxu0 0.0
      %1596 = vmatpush1.msra.mxu0 0.0
      %1597 = vmatprep.subr.mxu0 0.0
      %1598 = vmatpush1.msra.mxu0 0.0
      %1599 = vmatprep.subr.mxu0 0.0
      %1600 = vmatpush1.msra.mxu0 0.0
      %1601 = vmatprep.subr.mxu0 0.0
      %1602 = vmatpush1.msra.mxu0 0.0
      %1603 = vmatprep.subr.mxu0 0.0
      %1604 = vmatpush1.msra.mxu0 0.0
      %1605 = vmatprep.subr.mxu0 0.0
      %1606 = vmatpush1.msra.mxu0 0.0
      %1607 = vmatprep.subr.mxu0 0.0
      %1608 = vmatpush1.msra.mxu0 0.0
      %1609 = vmatprep.subr.mxu0 0.0
      %1610 = vmatpush1.msra.mxu0 0.0
      %1611 = vmatprep.subr.mxu0 0.0
      %1612 = vmatpush1.msra.mxu0 0.0
      %1613 = vmatprep.subr.mxu0 0.0
      %1614 = vmatpush1.msra.mxu0 0.0
      %1615 = vmatprep.subr.mxu0 0.0
      %1616 = vmatpush1.msra.mxu0 0.0
      %1617 = vmatprep.subr.mxu0 0.0
      %1618 = vmatpush1.msra.mxu0 0.0
      %1619 = vmatprep.subr.mxu0 0.0
      %1620 = vmatpush1.msra.mxu0 0.0
      %1621 = vmatprep.subr.mxu0 0.0
      %1622 = vmatpush1.msra.mxu0 0.0
      %1623 = vmatprep.mubr.f32.mxu0 0.0
      %1624 = vmatmul.mubr.f32.gmra.mrb[0].mxu0 %v1557
      %v1625 = vpop.f32.mrb[0].mxu0
      %v1626 = vadd.f32 %v1461, %v1625
      %v1627 = vpop.f32.mrb[0].mxu0
      %v1628 = vadd.f32 %v1461, %v1627
      %1629 = vdwg.mxu0
      %v1630 = vmax.f32 %v907, 0.0
      %v1631 = vmax.f32 %v909, 0.0
      %v1632 = vmax.f32 %v1267, 0.0
      %v1633 = vmax.f32 %v1269, 0.0
      %v1634 = vadd.f32 %v1630, %v1632
      %v1635 = vadd.f32 %v1631, %v1633
      %v1636 = vmax.f32 %v1626, 0.0
      %v1637 = vmax.f32 %v1628, 0.0
      %v1638 = vadd.f32 %v1634, %v1636
      %v1639 = vadd.f32 %v1635, %v1637
      %v1640 = vld [vmem:[%s7] sm:$0xff]
      %1642 = vset.pattern.permute.xlu0 0
      %1643 = vperm.xlu0 %1642, %v1640
      %v1644 = vpop.permute.xlu0 %1643
      %v1646 = vmul.f32 %v1638, %v1644
      %v1647 = vmul.f32 %v1639, %v1644
      %v1648 = vrot.slane %v1646, 4
      %v1649 = vadd.f32 %v1646, %v1648
      %v1650 = vrot.slane %v1649, 2
      %v1651 = vadd.f32 %v1649, %v1650
      %v1652 = vrot.slane %v1651, 1
      %v1653 = vadd.f32 %v1651, %v1652
      %v1654 = vrot.slane %v1647, 4
      %v1655 = vadd.f32 %v1647, %v1654
      %v1656 = vrot.slane %v1655, 2
      %v1657 = vadd.f32 %v1655, %v1656
      %v1658 = vrot.slane %v1657, 1
      %v1659 = vadd.f32 %v1657, %v1658
      %v1660 = vld [vmem:[#allocation3] sm:$0x1]
      %1662 = vset.pattern.permute.xlu0 0
      %1663 = vperm.xlu0 %1662, %v1660
      %v1664 = vpop.permute.xlu0 %1663
      %v1666 = vlaneseq
      %v1667 = vshrl.u32 %v1666, 7
      %v1668 = vsub.s32 0, %v1667
      %v1669 = vrot.slane %v1664, %v1668
      %v1670 = vadd.f32 %v1653, %v1669
      %v1671 = vadd.f32 %v1659, %v1669
      %v1672 = vsub.f32 0.0, %v1670
      %v1673 = vsub.f32 0.0, %v1671
      %v1674 = vmul.f32 %v1672, 0.999995
      %v1675 = vmul.f32 %v1673, 0.999995
      %v1676 = vmul.f32 %v1674, 1.442695
      %v1677 = vpow.pop %v1676
      %v1678 = vmul.f32 %v1675, 1.442695
      %v1679 = vpow.pop %v1678
      %v1680 = vadd.f32 %v1677, 1.0
      %v1681 = vadd.f32 %v1679, 1.0
      %v1682 = vrcp.pop %v1680
      %v1683 = vmul.f32 1.0, %v1682
      %v1684 = vrcp.pop %v1681
      %v1685 = vmul.f32 1.0, %v1684
      %v1688 = vcombine.low %v1683, %v1685
      %v1690 = vunpack.c.l.s4 1966171168
      %v1691 = vunpack.c.0.s8 %v1690
      %v1692 = vlaneseq
      %v1693 = vshrl.u32 %v1692, 7
      %v1694 = vsub.s32 %v1691, %v1693
      %v1695 = vrot.slane %v1688, %v1694
      %v1697 = vunpack.c.l.s4 1966171168
      %v1698 = vunpack.c.0.s8 %v1697
      %v1699 = vlaneseq
      %v1700 = vshrl.u32 %v1699, 7
      %v1701 = vsub.s32 %v1698, %v1700
      %v1702 = vrot.slane %v1695, %v1701
      %v1704 = vlaneseq
      %vm1705 = vcmp.ge.s32.totalorder %v1704, 0
      %vm1706 = vcmp.lt.s32.totalorder %v1704, 256
      %vm1707 = vmand %vm1705, %vm1706
      %s1708 = scalar_lea.vmem [#allocation2], 8
      %1709 = vst.msk [vmem:[%s1708] ss:$8 sm:$0x3] %vm1707, %v1702
      %1710 = vst.msk [vmem:[%s1708] ss:$8 sm:$0x0] %vm1707, %v1702
      %v1711 = vld [vmem:[#allocation2] ss:$8 sm:$0x7]
      %1712 = vrot.lane.b32.xlu0 %v537, 111
      %v1713 = vpop.permute.xlu0 %1712
      %v1714 = vrot.slane %v1713, 7
      %v1715 = vsel %vm568, %v1714, %v1713
      %v1717 = vmul.f32 %v1711, %v1715
      %1718 = vrot.lane.b32.xlu0 %v534, 113
      %v1719 = vpop.permute.xlu0 %1718
      %v1720 = vrot.slane %v1719, 7
      %v1721 = vsel %vm589, %v1720, %v1719
      %v1723 = vmul.f32 %v1711, %v1721
      %1724 = vrot.lane.b32.xlu0 %v537, 127
      %v1725 = vpop.permute.xlu0 %1724
      %v1726 = vrot.slane %v1725, 7
      %v1727 = vsel %vm601, %v1726, %v1725
      %v1729 = vmul.f32 %v1711, %v1727
      %s1730 = scalar_lea.vmem [#allocation2], 8
      %v1731 = vld [vmem:[%s1730] ss:$8 sm:$0x7]
      %1732 = vrot.lane.b32.xlu0 %v534, 1
      %v1733 = vpop.permute.xlu0 %1732
      %v1734 = vrot.slane %v1733, 7
      %v1735 = vsel %vm616, %v1734, %v1733
      %v1737 = vmul.f32 %v1731, %v1735
      %1738 = vrot.lane.b32.xlu0 %v537, 15
      %v1739 = vpop.permute.xlu0 %1738
      %v1740 = vrot.slane %v1739, 7
      %v1741 = vsel %vm628, %v1740, %v1739
      %v1743 = vmul.f32 %v1731, %v1741
      %1744 = vrot.lane.b32.xlu0 %v534, 17
      %v1745 = vpop.permute.xlu0 %1744
      %v1746 = vrot.slane %v1745, 7
      %v1747 = vsel %vm640, %v1746, %v1745
      %v1749 = vmul.f32 %v1731, %v1747
      %1751 = vrot.lane.b32.xlu0 %v1711, 127
      %v1752 = vpop.permute.xlu0 %1751
      %v1753 = vrot.slane %v1752, 1
      %v1754 = vsel %vm601, %v1752, %v1753
      %v1756 = vadd.f32 %v1717, %v1754
      %1758 = vrot.lane.b32.xlu0 %v1729, 114
      %v1759 = vpop.permute.xlu0 %1758
      %v1760 = vrot.slane %v1759, 1
      %vm1761 = vcmask 932864
      %v1762 = vsel %vm1761, %v1759, %v1760
      %v1764 = vadd.f32 %v1723, %v1762
      %1766 = vrot.lane.b32.xlu0 %v1764, 126
      %v1767 = vpop.permute.xlu0 %1766
      %v1768 = vrot.slane %v1767, 1
      %v1769 = vsel %vm668, %v1767, %v1768
      %v1771 = vadd.f32 %v1756, %v1769
      %1773 = vrot.lane.b32.xlu0 %v1743, 114
      %v1774 = vpop.permute.xlu0 %1773
      %v1775 = vrot.slane %v1774, 1
      %v1776 = vsel %vm1761, %v1774, %v1775
      %v1778 = vadd.f32 %v1737, %v1776
      %1780 = vrot.lane.b32.xlu0 %v1749, 127
      %v1781 = vpop.permute.xlu0 %1780
      %v1782 = vrot.slane %v1781, 1
      %v1783 = vsel %vm601, %v1781, %v1782
      %v1785 = vadd.f32 %v1731, %v1783
      %1787 = vrot.lane.b32.xlu0 %v1785, 113
      %v1788 = vpop.permute.xlu0 %1787
      %v1789 = vrot.slane %v1788, 1
      %v1790 = vsel %vm589, %v1788, %v1789
      %v1792 = vadd.f32 %v1778, %v1790
      %1794 = vrot.lane.b32.xlu0 %v1792, 110
      %v1795 = vpop.permute.xlu0 %1794
      %v1796 = vrot.slane %v1795, 7
      %v1797 = vsel %vm697, %v1796, %v1795
      %v1799 = vadd.f32 %v1771, %v1797
      %v1800 = vmul.f32 %v1683, 9.0
      %v1801 = vmul.f32 %v1685, 9.0
      %v1803 = vlaneseq
      %v1804 = vshrl.u32 %v1803, 7
      %v1805 = vsub.s32 0, %v1804
      %v1806 = vrot.slane %v1799, %v1805
      %v1807 = vlaneseq
      %v1808 = vshrl.u32 %v1807, 7
      %v1809 = vsub.s32 1, %v1808
      %v1810 = vrot.slane %v1799, %v1809
      %v1811 = vlaneseq
      %v1812 = vshrl.u32 %v1811, 7
      %v1813 = vsub.s32 2, %v1812
      %v1814 = vrot.slane %v1799, %v1813
      %1815 = vrot.lane.b32.xlu0 %v1806, 17
      %v1816 = vpop.permute.xlu0 %1815
      %1817 = vrot.lane.b32.xlu0 %v1810, 17
      %v1818 = vpop.permute.xlu0 %1817
      %1819 = vrot.lane.b32.xlu0 %v1814, 17
      %v1820 = vpop.permute.xlu0 %1819
      %v1821 = vsel %vm640, %v1816, %v1818
      %v1822 = vsel %vm640, %v1818, %v1820
      %v1825 = vsub.f32 %v1800, %v1821
      %v1826 = vsub.f32 %v1801, %v1822
      %v1827 = vmax.f32 %v1825, 0.0
      %v1828 = vmax.f32 %v1826, 0.0
      %v1829 = vlaneseq
      %v1830 = vshrl.u32 %v1829, 7
      %v1831 = vsub.s32 0, %v1830
      %v1832 = vrot.slane %v1827, %v1831
      %v1833 = vlaneseq
      %v1834 = vshrl.u32 %v1833, 7
      %v1835 = vsub.s32 0, %v1834
      %v1836 = vrot.slane %v1828, %v1835
      %v1837 = vmul.f32 %v524, %v1832
      %v1838 = vmul.f32 %v525, %v1836
      %v1839 = vld [vmem:[%s9] sm:$0xff]
      %v1840 = vld [vmem:[%s9 + $0x8] sm:$0xff]
      %v1841 = vld [vmem:[%s9 + $0x10] sm:$0xff]
      %v1842 = vld [vmem:[%s9 + $0x18] sm:$0xff]
      %v1843 = vld [vmem:[%s9 + $0x20] sm:$0xff]
      %v1844 = vld [vmem:[%s9 + $0x28] sm:$0xff]
      %v1845 = vld [vmem:[%s9 + $0x30] sm:$0xff]
      %v1846 = vld [vmem:[%s9 + $0x38] sm:$0xff]
      %v1847 = vld [vmem:[%s9 + $0x40] sm:$0xff]
      %v1848 = vld [vmem:[%s9 + $0x48] sm:$0xff]
      %v1849 = vld [vmem:[%s9 + $0x50] sm:$0xff]
      %v1850 = vld [vmem:[%s9 + $0x58] sm:$0xff]
      %v1851 = vld [vmem:[%s9 + $0x60] sm:$0xff]
      %v1852 = vld [vmem:[%s9 + $0x68] sm:$0xff]
      %v1853 = vld [vmem:[%s9 + $0x70] sm:$0xff]
      %v1854 = vld [vmem:[%s9 + $0x78] sm:$0xff]
      %v1855 = vld [vmem:[%s9 + $0x80] sm:$0xff]
      %v1856 = vld [vmem:[%s9 + $0x88] sm:$0xff]
      %v1857 = vld [vmem:[%s9 + $0x90] sm:$0xff]
      %v1858 = vld [vmem:[%s9 + $0x98] sm:$0xff]
      %v1859 = vld [vmem:[%s9 + $0xa0] sm:$0xff]
      %v1860 = vld [vmem:[%s9 + $0xa8] sm:$0xff]
      %v1861 = vld [vmem:[%s9 + $0xb0] sm:$0xff]
      %v1862 = vld [vmem:[%s9 + $0xb8] sm:$0xff]
      %v1863 = vld [vmem:[%s9 + $0xc0] sm:$0xff]
      %v1864 = vld [vmem:[%s9 + $0xc8] sm:$0xff]
      %v1865 = vld [vmem:[%s9 + $0xd0] sm:$0xff]
      %v1866 = vld [vmem:[%s9 + $0xd8] sm:$0xff]
      %v1867 = vld [vmem:[%s9 + $0xe0] sm:$0xff]
      %v1868 = vld [vmem:[%s9 + $0xe8] sm:$0xff]
      %v1869 = vld [vmem:[%s9 + $0xf0] sm:$0xff]
      %v1870 = vld [vmem:[%s9 + $0xf8] sm:$0xff]
      %v1871 = vld [vmem:[%s9 + $0x100] sm:$0xff]
      %v1872 = vld [vmem:[%s9 + $0x108] sm:$0xff]
      %v1873 = vld [vmem:[%s9 + $0x110] sm:$0xff]
      %v1874 = vld [vmem:[%s9 + $0x118] sm:$0xff]
      %v1875 = vld [vmem:[%s9 + $0x120] sm:$0xff]
      %v1876 = vld [vmem:[%s9 + $0x128] sm:$0xff]
      %v1877 = vld [vmem:[%s9 + $0x130] sm:$0xff]
      %v1878 = vld [vmem:[%s9 + $0x138] sm:$0xff]
      %v1879 = vld [vmem:[%s9 + $0x140] sm:$0xff]
      %v1880 = vld [vmem:[%s9 + $0x148] sm:$0xff]
      %v1881 = vld [vmem:[%s9 + $0x150] sm:$0xff]
      %v1882 = vld [vmem:[%s9 + $0x158] sm:$0xff]
      %v1883 = vld [vmem:[%s9 + $0x160] sm:$0xff]
      %v1884 = vld [vmem:[%s9 + $0x168] sm:$0xff]
      %v1885 = vld [vmem:[%s9 + $0x170] sm:$0xff]
      %v1886 = vld [vmem:[%s9 + $0x178] sm:$0xff]
      %v1887 = vld [vmem:[%s9 + $0x180] sm:$0xff]
      %v1888 = vld [vmem:[%s9 + $0x188] sm:$0xff]
      %v1889 = vld [vmem:[%s9 + $0x190] sm:$0xff]
      %v1890 = vld [vmem:[%s9 + $0x198] sm:$0xff]
      %v1891 = vld [vmem:[%s9 + $0x1a0] sm:$0xff]
      %v1892 = vld [vmem:[%s9 + $0x1a8] sm:$0xff]
      %v1893 = vld [vmem:[%s9 + $0x1b0] sm:$0xff]
      %v1894 = vld [vmem:[%s9 + $0x1b8] sm:$0xff]
      %v1895 = vld [vmem:[%s9 + $0x1c0] sm:$0xff]
      %v1896 = vld [vmem:[%s9 + $0x1c8] sm:$0xff]
      %v1897 = vld [vmem:[%s9 + $0x1d0] sm:$0xff]
      %v1898 = vld [vmem:[%s9 + $0x1d8] sm:$0xff]
      %v1899 = vld [vmem:[%s9 + $0x1e0] sm:$0xff]
      %v1900 = vld [vmem:[%s9 + $0x1e8] sm:$0xff]
      %v1901 = vld [vmem:[%s9 + $0x1f0] sm:$0xff]
      %v1902 = vld [vmem:[%s9 + $0x1f8] sm:$0xff]
      %1903 = vmatprep.subr.mxu0 %v1840
      %1904 = vmatpush1.msra.mxu0 %v1839
      %1905 = vmatprep.subr.mxu0 %v1842
      %1906 = vmatpush1.msra.mxu0 %v1841
      %1907 = vmatprep.subr.mxu0 %v1844
      %1908 = vmatpush1.msra.mxu0 %v1843
      %1909 = vmatprep.subr.mxu0 %v1846
      %1910 = vmatpush1.msra.mxu0 %v1845
      %1911 = vmatprep.subr.mxu0 %v1848
      %1912 = vmatpush1.msra.mxu0 %v1847
      %1913 = vmatprep.subr.mxu0 %v1850
      %1914 = vmatpush1.msra.mxu0 %v1849
      %1915 = vmatprep.subr.mxu0 %v1852
      %1916 = vmatpush1.msra.mxu0 %v1851
      %1917 = vmatprep.subr.mxu0 %v1854
      %1918 = vmatpush1.msra.mxu0 %v1853
      %1919 = vmatprep.subr.mxu0 %v1856
      %1920 = vmatpush1.msra.mxu0 %v1855
      %1921 = vmatprep.subr.mxu0 %v1858
      %1922 = vmatpush1.msra.mxu0 %v1857
      %1923 = vmatprep.subr.mxu0 %v1860
      %1924 = vmatpush1.msra.mxu0 %v1859
      %1925 = vmatprep.subr.mxu0 %v1862
      %1926 = vmatpush1.msra.mxu0 %v1861
      %1927 = vmatprep.subr.mxu0 %v1864
      %1928 = vmatpush1.msra.mxu0 %v1863
      %1929 = vmatprep.subr.mxu0 %v1866
      %1930 = vmatpush1.msra.mxu0 %v1865
      %1931 = vmatprep.subr.mxu0 %v1868
      %1932 = vmatpush1.msra.mxu0 %v1867
      %1933 = vmatprep.subr.mxu0 %v1870
      %1934 = vmatpush1.msra.mxu0 %v1869
      %1935 = vmatprep.subr.mxu0 %v1872
      %1936 = vmatpush1.msra.mxu0 %v1871
      %1937 = vmatprep.subr.mxu0 %v1874
      %1938 = vmatpush1.msra.mxu0 %v1873
      %1939 = vmatprep.subr.mxu0 %v1876
      %1940 = vmatpush1.msra.mxu0 %v1875
      %1941 = vmatprep.subr.mxu0 %v1878
      %1942 = vmatpush1.msra.mxu0 %v1877
      %1943 = vmatprep.subr.mxu0 %v1880
      %1944 = vmatpush1.msra.mxu0 %v1879
      %1945 = vmatprep.subr.mxu0 %v1882
      %1946 = vmatpush1.msra.mxu0 %v1881
      %1947 = vmatprep.subr.mxu0 %v1884
      %1948 = vmatpush1.msra.mxu0 %v1883
      %1949 = vmatprep.subr.mxu0 %v1886
      %1950 = vmatpush1.msra.mxu0 %v1885
      %1951 = vmatprep.subr.mxu0 %v1888
      %1952 = vmatpush1.msra.mxu0 %v1887
      %1953 = vmatprep.subr.mxu0 %v1890
      %1954 = vmatpush1.msra.mxu0 %v1889
      %1955 = vmatprep.subr.mxu0 %v1892
      %1956 = vmatpush1.msra.mxu0 %v1891
      %1957 = vmatprep.subr.mxu0 %v1894
      %1958 = vmatpush1.msra.mxu0 %v1893
      %1959 = vmatprep.subr.mxu0 %v1896
      %1960 = vmatpush1.msra.mxu0 %v1895
      %1961 = vmatprep.subr.mxu0 %v1898
      %1962 = vmatpush1.msra.mxu0 %v1897
      %1963 = vmatprep.subr.mxu0 %v1900
      %1964 = vmatpush1.msra.mxu0 %v1899
      %1965 = vmatprep.subr.mxu0 %v1902
      %1966 = vmatpush1.msra.mxu0 %v1901
      %1967 = vmatprep.mubr.f32.mxu0 %v525
      %1968 = vmatmul.mubr.f32.gmra.mrb[0].mxu0 %v524
      %v1969 = vpop.f32.mrb[0].mxu0
      %v1970 = vadd.f32 0.0, %v1969
      %v1971 = vpop.f32.mrb[0].mxu0
      %v1972 = vadd.f32 0.0, %v1971
      %1973 = vdwg.mxu0
      %1974 = vst [vmem:[#allocation2 + $0x8] sm:$0xff] %v1970
      %1975 = vst [vmem:[#allocation2 + $0x10] sm:$0xff] %v1972
      %v1976 = vld [vmem:[#allocation2 + $0x8] sm:$0xff]
      %v1977 = vld [vmem:[#allocation2 + $0x10] sm:$0xff]
      %v1978 = vld [vmem:[#allocation2 + $0x8] sm:$0xff]
      %v1979 = vld [vmem:[#allocation2 + $0x10] sm:$0xff]
      %v1980 = vld [vmem:[#allocation2 + $0x18] sm:$0xff]
      %1984 = vrot.lane.b32.xlu0 %v1978, 127
      %v1985 = vpop.permute.xlu0 %1984
      %1986 = vrot.lane.b32.xlu0 %v1979, 127
      %v1987 = vpop.permute.xlu0 %1986
      %1988 = vrot.lane.b32.xlu0 %v1980, 127
      %v1989 = vpop.permute.xlu0 %1988
      %v1990 = vsel %vm601, %v1985, %v1987
      %v1991 = vsel %vm601, %v1987, %v1989
      %1994 = vrot.lane.b32.xlu0 %v1978, 126
      %v1995 = vpop.permute.xlu0 %1994
      %1996 = vrot.lane.b32.xlu0 %v1979, 126
      %v1997 = vpop.permute.xlu0 %1996
      %1998 = vrot.lane.b32.xlu0 %v1980, 126
      %v1999 = vpop.permute.xlu0 %1998
      %v2000 = vsel %vm668, %v1995, %v1997
      %v2001 = vsel %vm668, %v1997, %v1999
      %2004 = vrot.lane.b32.xlu0 %v1978, 112
      %v2005 = vpop.permute.xlu0 %2004
      %2006 = vrot.lane.b32.xlu0 %v1979, 112
      %v2007 = vpop.permute.xlu0 %2006
      %2008 = vrot.lane.b32.xlu0 %v1980, 112
      %v2009 = vpop.permute.xlu0 %2008
      %v2010 = vsel %vm680, %v2005, %v2007
      %v2011 = vsel %vm680, %v2007, %v2009
      %2014 = vrot.lane.b32.xlu0 %v1978, 111
      %v2015 = vpop.permute.xlu0 %2014
      %2016 = vrot.lane.b32.xlu0 %v1979, 111
      %v2017 = vpop.permute.xlu0 %2016
      %2018 = vrot.lane.b32.xlu0 %v1980, 111
      %v2019 = vpop.permute.xlu0 %2018
      %v2020 = vsel %vm568, %v2015, %v2017
      %v2021 = vsel %vm568, %v2017, %v2019
      %2024 = vrot.lane.b32.xlu0 %v1978, 110
      %v2025 = vpop.permute.xlu0 %2024
      %2026 = vrot.lane.b32.xlu0 %v1979, 110
      %v2027 = vpop.permute.xlu0 %2026
      %2028 = vrot.lane.b32.xlu0 %v1980, 110
      %v2029 = vpop.permute.xlu0 %2028
      %v2030 = vsel %vm697, %v2025, %v2027
      %v2031 = vsel %vm697, %v2027, %v2029
      %2034 = vrot.lane.b32.xlu0 %v1978, 96
      %v2035 = vpop.permute.xlu0 %2034
      %2036 = vrot.lane.b32.xlu0 %v1979, 96
      %v2037 = vpop.permute.xlu0 %2036
      %2038 = vrot.lane.b32.xlu0 %v1980, 96
      %v2039 = vpop.permute.xlu0 %2038
      %v2040 = vsel %vm709, %v2035, %v2037
      %v2041 = vsel %vm709, %v2037, %v2039
      %2044 = vrot.lane.b32.xlu0 %v1978, 95
      %v2045 = vpop.permute.xlu0 %2044
      %2046 = vrot.lane.b32.xlu0 %v1979, 95
      %v2047 = vpop.permute.xlu0 %2046
      %2048 = vrot.lane.b32.xlu0 %v1980, 95
      %v2049 = vpop.permute.xlu0 %2048
      %v2050 = vsel %vm721, %v2045, %v2047
      %v2051 = vsel %vm721, %v2047, %v2049
      %2054 = vrot.lane.b32.xlu0 %v1978, 94
      %v2055 = vpop.permute.xlu0 %2054
      %2056 = vrot.lane.b32.xlu0 %v1979, 94
      %v2057 = vpop.permute.xlu0 %2056
      %2058 = vrot.lane.b32.xlu0 %v1980, 94
      %v2059 = vpop.permute.xlu0 %2058
      %v2060 = vsel %vm733, %v2055, %v2057
      %v2061 = vsel %vm733, %v2057, %v2059
      %v2064 = vld [vmem:[%s10] sm:$0xff]
      %v2065 = vld [vmem:[%s11] sm:$0xff]
      %2067 = vset.pattern.permute.xlu0 0
      %2068 = vperm.xlu0 %2067, %v2065
      %v2069 = vpop.permute.xlu0 %2068
      %v2072 = vsel %vm836, %v2064, 0
      %2074 = vmatprep.subr.mxu0 %v1977
      %2075 = vmatpush1.msra.mxu0 %v1976
      %2076 = vmatprep.subr.mxu0 %v1991
      %2077 = vmatpush1.msra.mxu0 %v1990
      %2078 = vmatprep.subr.mxu0 %v2001
      %2079 = vmatpush1.msra.mxu0 %v2000
      %2080 = vmatprep.subr.mxu0 %v2011
      %2081 = vmatpush1.msra.mxu0 %v2010
      %2082 = vmatprep.subr.mxu0 %v2021
      %2083 = vmatpush1.msra.mxu0 %v2020
      %2084 = vmatprep.subr.mxu0 %v2031
      %2085 = vmatpush1.msra.mxu0 %v2030
      %2086 = vmatprep.subr.mxu0 %v2041
      %2087 = vmatpush1.msra.mxu0 %v2040
      %2088 = vmatprep.subr.mxu0 %v2051
      %2089 = vmatpush1.msra.mxu0 %v2050
      %2090 = vmatprep.subr.mxu0 %v2061
      %2091 = vmatpush1.msra.mxu0 %v2060
      %2092 = vmatprep.subr.mxu0 0.0
      %2093 = vmatpush1.msra.mxu0 0.0
      %2094 = vmatprep.subr.mxu0 0.0
      %2095 = vmatpush1.msra.mxu0 0.0
      %2096 = vmatprep.subr.mxu0 0.0
      %2097 = vmatpush1.msra.mxu0 0.0
      %2098 = vmatprep.subr.mxu0 0.0
      %2099 = vmatpush1.msra.mxu0 0.0
      %2100 = vmatprep.subr.mxu0 0.0
      %2101 = vmatpush1.msra.mxu0 0.0
      %2102 = vmatprep.subr.mxu0 0.0
      %2103 = vmatpush1.msra.mxu0 0.0
      %2104 = vmatprep.subr.mxu0 0.0
      %2105 = vmatpush1.msra.mxu0 0.0
      %2106 = vmatprep.subr.mxu0 0.0
      %2107 = vmatpush1.msra.mxu0 0.0
      %2108 = vmatprep.subr.mxu0 0.0
      %2109 = vmatpush1.msra.mxu0 0.0
      %2110 = vmatprep.subr.mxu0 0.0
      %2111 = vmatpush1.msra.mxu0 0.0
      %2112 = vmatprep.subr.mxu0 0.0
      %2113 = vmatpush1.msra.mxu0 0.0
      %2114 = vmatprep.subr.mxu0 0.0
      %2115 = vmatpush1.msra.mxu0 0.0
      %2116 = vmatprep.subr.mxu0 0.0
      %2117 = vmatpush1.msra.mxu0 0.0
      %2118 = vmatprep.subr.mxu0 0.0
      %2119 = vmatpush1.msra.mxu0 0.0
      %2120 = vmatprep.subr.mxu0 0.0
      %2121 = vmatpush1.msra.mxu0 0.0
      %2122 = vmatprep.subr.mxu0 0.0
      %2123 = vmatpush1.msra.mxu0 0.0
      %2124 = vmatprep.subr.mxu0 0.0
      %2125 = vmatpush1.msra.mxu0 0.0
      %2126 = vmatprep.subr.mxu0 0.0
      %2127 = vmatpush1.msra.mxu0 0.0
      %2128 = vmatprep.subr.mxu0 0.0
      %2129 = vmatpush1.msra.mxu0 0.0
      %2130 = vmatprep.subr.mxu0 0.0
      %2131 = vmatpush1.msra.mxu0 0.0
      %2132 = vmatprep.subr.mxu0 0.0
      %2133 = vmatpush1.msra.mxu0 0.0
      %2134 = vmatprep.subr.mxu0 0.0
      %2135 = vmatpush1.msra.mxu0 0.0
      %2136 = vmatprep.subr.mxu0 0.0
      %2137 = vmatpush1.msra.mxu0 0.0
      %2138 = vmatprep.mubr.f32.mxu0 0.0
      %2139 = vmatmul.mubr.f32.gmra.mrb[0].mxu0 %v2072
      %v2140 = vpop.f32.mrb[0].mxu0
      %v2141 = vadd.f32 %v2069, %v2140
      %v2142 = vpop.f32.mrb[0].mxu0
      %v2143 = vadd.f32 %v2069, %v2142
      %2144 = vdwg.mxu0
      %v2145 = vmul.f32 %v2141, 0.999995
      %v2146 = vmul.f32 %v2143, 0.999995
      %v2147 = vmax.f32 %v2145, 0.0
      %v2148 = vmax.f32 %v2146, 0.0
      %vm2149 = vcmp.le.f32.partialorder %v526, 13.0
      %v2150 = vsel %vm2149, 1, 0
      %v2151 = vcvt.s32.f32 %v2150
      %vm2152 = vcmp.le.f32.partialorder %v527, 13.0
      %v2153 = vsel %vm2152, 1, 0
      %v2154 = vcvt.s32.f32 %v2153
      %v2155 = vmul.f32 %v2151, %v2154
      %v2157 = vlaneseq
      %v2158 = vshrl.u32 %v2157, 7
      %v2159 = vsub.s32 0, %v2158
      %v2160 = vrot.slane %v2155, %v2159
      %v2161 = vlaneseq
      %v2162 = vshrl.u32 %v2161, 7
      %v2163 = vsub.s32 1, %v2162
      %v2164 = vrot.slane %v2155, %v2163
      %v2167 = vmul.f32 %v2147, %v2160
      %v2168 = vmul.f32 %v2148, %v2164
      %v2169 = vmax.f32 %v2167, %v2168
      %2170 = vmax.xlane.f32.xlu0 %v2169
      %v2171 = vpop.xlane.xlu0 %2170
      %v2172 = vld [vmem:[%s12] sm:$0xff]
      %v2173 = vmul.f32 %v2171, %v2172
      %vm2174 = vcmask 31744
      %v2175 = vsel %vm2174, %v2173, 0.0
      %v2176 = vrot.slane %v2175, 4
      %v2177 = vadd.f32 %v2175, %v2176
      %v2178 = vrot.slane %v2177, 2
      %v2179 = vadd.f32 %v2177, %v2178
      %v2180 = vrot.slane %v2179, 1
      %v2181 = vadd.f32 %v2179, %v2180
      %v2182 = vmax.f32 %v2181, 0.0
      %v2183 = vld [vmem:[%s13] sm:$0xff]
      %v2184 = vmul.f32 %v2183, %v2182
      %v2185 = vsel %vm2174, %v2184, 0.0
      %2186 = vadd.xlane.f32.xlu0 %v2185
      %v2187 = vpop.xlane.xlu0 %2186
      %v2188 = vsub.f32 0.0, %v2187
      %v2189 = vmul.f32 %v2188, 1.442695
      %v2190 = vpow.pop %v2189
      %v2191 = vadd.f32 %v2190, 1.0
      %v2192 = vrcp.pop %v2191
      %v2193 = vmul.f32 1.0, %v2192
      %v2194 = vadd.f32 %v2193, %v2171
      %v2195 = vadd.f32 %v2194, 1.0
      %v2196 = vmul.f32 %v1837, %v2195
      %v2197 = vmul.f32 %v1838, %v2195
      %2198 = vst [vmem:[%s523] sm:$0xff] %v2196
      %2199 = vst [vmem:[%s523 + $0x8] sm:$0xff] %v2197
      %p2200 = scmp.lt.s32.totalorder %s29, 1
      %s2201 = scalar_select %p2200, %s29, 1
      %s2202 = smul.addr %s2201, 2
      %s2203 = smul.addr %s2202, 8
      %s2204 = scalar_lea.vmem %s16, %s2203
      // Predicated region
      $region85: #{local_freattention_forward.1} parent=83 // pred_check
        %p2205 = pneg %p388
      $region86: #{local_freattention_forward.1} parent=83 // pred_check_branch
        %2207 = sbr.rel (%p2205) target = $region88
      $region87: #{local_freattention_forward.1} parent=83 // pred_region
        _
      $region88: #{local_freattention_forward.1} parent=83 // pred_fallthru
        _
    $region84: #{local_freattention_forward.1} parent=5 // pred_fallthru
      _
    %p2208 = scmp.le.s32.totalorder 2, %s24
    // Predicated region
    $region89: #{local_freattention_forward.1} parent=5 // pred_check
      %p2209 = pneg %p2208
    $region90: #{local_freattention_forward.1} parent=5 // pred_check_branch
      %2211 = sbr.rel (%p2209) target = $region92
    $region91: #{local_freattention_forward.1} parent=5 // pred_region
      %s2212 = ssub.s32 %s24, 2
      // Predicated region
      $region93: #{local_freattention_forward.1} parent=91 // pred_check
        %p2213 = pneg %p394
      $region94: #{local_freattention_forward.1} parent=91 // pred_check_branch
        %2215 = sbr.rel (%p2213) target = $region96
      $region95: #{local_freattention_forward.1} parent=91 // pred_region
        %p2216 = scmp.lt.s32.totalorder %s30, 1
        %s2217 = scalar_select %p2216, %s30, 1
        %s2218 = smul.addr %s2217, 2
        %s2219 = smul.addr %s2218, 8
        %s2220 = scalar_lea.vmem %s16, %s2219
      $region96: #{local_freattention_forward.1} parent=91 // pred_fallthru
        _
    $region92: #{local_freattention_forward.1} parent=5 // pred_fallthru
      _
  $region6: #{local_freattention_forward.1} parent=0 // loop_footer
    %s28 = sadd.s32 1, %s24
  $region7: #{local_freattention_forward.1} parent=0 // loop_footer_branch
    %23 = sbr.rel target = $region3
  $region8: #{local_freattention_forward.1} parent=0 // loop_exit
    _

</llo_original>
